<compile_context>
chip_gen: v6e
topology: v6e:2x2x1
jax: 0.10.0
libtpu: 0.0.40
codegen_flags: <defaults>
</compile_context>

<pallas_src>
import jax
import jax.numpy as jnp
import numpy as np
from jax.experimental import pallas as pl
from jax.experimental.pallas import tpu as pltpu


def _round_up(v, m):
    return (v + m - 1) // m * m


def _choose_time_chunk(T, Bp, Hp, D, itemsize, budget_bytes):
    """Largest Tc whose per-chunk VMEM (f32 xproj + 2x x chunk) fits the budget."""
    G4 = 4 * Hp
    per_step = Bp * G4 * 4 + 2 * Bp * D * itemsize
    tc = max(1, budget_bytes // per_step)
    tc = min(int(tc), T)
    if tc > 8:
        tc = (tc // 8) * 8   # keep the partial-unroll factor a clean divisor
    return tc


def _make_lstm_kernel(T_true, Tc, Bp, Hp, matmul_dtype, unroll, need_mask):
    def kernel(x_ref, wih_ref, whh_ref, b_ref, o_ref, xproj_sc, h_sc, c_sc):
        chunk = pl.program_id(0)
        n_chunks = pl.num_programs(0)

        # Initialize persistent carries on the first chunk only.
        @pl.when(chunk == 0)
        def _():
            h_sc[...] = jnp.zeros_like(h_sc)
            c_sc[...] = jnp.zeros_like(c_sc)

        # ---- Phase 1: chunk-local non-recurrent GEMM (bias folded in) ------
        # (Tc*Bp, D) @ (D, 4*Hp) + (1, 4*Hp)  ->  (Tc*Bp, 4*Hp)
        xproj_sc[...] = (
            jnp.dot(x_ref[...], wih_ref[...],
                    preferred_element_type=jnp.float32)
            + b_ref[...]
        )
        # TODO(synk): interleave this GEMM into the previous chunk's
        # recurrence loop to fill MXU slack on the latency-bound serial path.

        t0 = chunk * Tc

        # ---- Phase 2: serial recurrence over the chunk's timesteps ---------
        # TODO(synk): hold W_hh staged in the MXU across the loop via
        # pltpu.matmul_push_rhs / matmul_acc_lhs / matmul_pop (per-gate across
        # MXUs) when Hp*4Hp fits the weight staging; jnp.dot fallback here.
        def step(t, carry):
            h_prev, c_prev = carry
            row = pl.multiple_of(t * Bp, Bp)      # sublane-aligned slice start
            gates = xproj_sc[pl.ds(row, Bp), :] + jnp.dot(
                h_prev.astype(matmul_dtype), whh_ref[...],
                preferred_element_type=jnp.float32)
            # Per-gate slices are 128-lane aligned (each gate block is Hp wide).
            i_g = jax.nn.sigmoid(gates[:, 0 * Hp:1 * Hp])
            f_g = jax.nn.sigmoid(gates[:, 1 * Hp:2 * Hp])
            g_g = jnp.tanh(gates[:, 2 * Hp:3 * Hp])
            o_g = jax.nn.sigmoid(gates[:, 3 * Hp:4 * Hp])
            c_new = f_g * c_prev + i_g * g_g
            h_new = o_g * jnp.tanh(c_new)
            if need_mask:
                # Timesteps past the true sequence length (time padded to a
                # multiple of Tc) must not update the carries.
                keep = ((t0 + t) < T_true).astype(jnp.float32)
                keep_v = jnp.full((Bp, Hp), keep, dtype=jnp.float32)
                h_new = keep_v * h_new + (1.0 - keep_v) * h_prev
                c_new = keep_v * c_new + (1.0 - keep_v) * c_prev
            return h_new, c_new

        h_fin, c_fin = jax.lax.fori_loop(
            0, Tc, step, (h_sc[...], c_sc[...]), unroll=unroll)
        h_sc[...] = h_fin
        c_sc[...] = c_fin

        # Output block has a constant index map -> stays resident across the
        # grid; single final write on the last chunk.
        @pl.when(chunk == n_chunks - 1)
        def _():
            o_ref[...] = h_fin.astype(o_ref.dtype)

    return kernel


def sensor_encoder_forward(x, w_ih, w_hh, b_ih, b_hh, *,
                           matmul_dtype=jnp.float32,
                           time_chunk=None,
                           chunk_vmem_budget=8 * 1024 * 1024):
    """Final hidden state of nn.LSTM(input_dim, hidden_dim, batch_first=True).

    x: (B, T, D) float32; w_ih: (4H, D); w_hh: (4H, H); b_ih/b_hh: (4H,).
    Returns hn.squeeze(0): (B, H).

    matmul_dtype: jnp.bfloat16 is MXU-native on v5e/v6e/v7x and halves weight
    VMEM/vld traffic; recurrence carries and gate math stay float32.
    """
    B, T, D = x.shape
    H = w_hh.shape[1]
    Bp = _round_up(B, 8)       # sublane alignment
    Hp = _round_up(H, 128)     # lane alignment per gate block
    G4 = 4 * Hp
    itemsize = jnp.dtype(matmul_dtype).itemsize

    if time_chunk is None:
        Tc = _choose_time_chunk(T, Bp, Hp, D, itemsize, chunk_vmem_budget)
    else:
        Tc = max(1, min(int(time_chunk), T))
    n_chunks = -(-T // Tc)
    T_pad = n_chunks * Tc

    # Time-major, batch/time padded; the (T_pad, Bp, D) -> (T_pad*Bp, D)
    # flatten is a free reshape (no data movement).
    # TODO(synk): fold the time-major transpose into the BlockSpec/DMA to
    # drop one extra HBM pass over x at large T*B*D.
    x_tm = jnp.transpose(x, (1, 0, 2))                          # (T, B, D)
    x_tm = jnp.pad(x_tm, ((0, T_pad - T), (0, Bp - B), (0, 0)))  # (T_pad, Bp, D)
    x_flat = x_tm.reshape(T_pad * Bp, D).astype(matmul_dtype)

    # Per-gate padded weight layout: gate g occupies lanes [g*Hp, g*Hp + H);
    # padded lanes/rows are exactly zero so padded hidden units remain zero.
    w_ih_g = jnp.transpose(w_ih.reshape(4, H, D), (0, 2, 1))      # (4, D, H)
    w_ih_g = jnp.pad(w_ih_g, ((0, 0), (0, 0), (0, Hp - H)))       # (4, D, Hp)
    wih_pad = jnp.transpose(w_ih_g, (1, 0, 2)).reshape(D, G4)

    w_hh_g = jnp.transpose(w_hh.reshape(4, H, H), (0, 2, 1))      # (4, Hin, Hout)
    w_hh_g = jnp.pad(w_hh_g, ((0, 0), (0, Hp - H), (0, Hp - H)))  # (4, Hp, Hp)
    whh_pad = jnp.transpose(w_hh_g, (1, 0, 2)).reshape(Hp, G4)

    bias = (b_ih + b_hh).reshape(4, H)
    bias_pad = jnp.pad(bias, ((0, 0), (0, Hp - H))).reshape(1, G4)

    wih_pad = wih_pad.astype(matmul_dtype)
    whh_pad = whh_pad.astype(matmul_dtype)
    bias_pad = bias_pad.astype(jnp.float32)

    # Partial unroll for the in-chunk recurrence (always divides Tc).
    if Tc <= 8:
        unroll = Tc
    elif Tc % 8 == 0:
        unroll = 8
    elif Tc % 4 == 0:
        unroll = 4
    elif Tc % 2 == 0:
        unroll = 2
    else:
        unroll = 1

    kernel = _make_lstm_kernel(T, Tc, Bp, Hp, matmul_dtype, unroll,
                               need_mask=(T_pad != T))

    # Explicit VMEM budget: double-buffered x chunk + resident weights/bias/
    # output (counted x2 conservatively) + scratch, with 2x headroom.
    vmem_bytes = (
        2 * Tc * Bp * D * itemsize        # x chunk (double-buffered)
        + 2 * D * G4 * itemsize           # W_ih (resident block)
        + 2 * Hp * G4 * itemsize          # W_hh (resident block)
        + 2 * G4 * 4                      # bias
        + 2 * Bp * Hp * 4                 # output block
        + Tc * Bp * G4 * 4                # xproj scratch
        + 2 * Bp * Hp * 4                 # h/c carries
    )
    vmem_limit = int(min(max(2 * vmem_bytes, 32 * 1024 * 1024),
                         110 * 1024 * 1024))

    out = pl.pallas_call(
        kernel,
        out_shape=jax.ShapeDtypeStruct((Bp, Hp), x.dtype),
        grid_spec=pltpu.PrefetchScalarGridSpec(
            num_scalar_prefetch=0,
            grid=(n_chunks,),                                   # time chunks
            in_specs=[
                pl.BlockSpec((Tc * Bp, D), lambda i: (i, 0)),   # x time chunk
                pl.BlockSpec((D, G4), lambda i: (0, 0)),        # W_ih (resident)
                pl.BlockSpec((Hp, G4), lambda i: (0, 0)),       # W_hh (resident)
                pl.BlockSpec((1, G4), lambda i: (0, 0)),        # bias
            ],
            out_specs=pl.BlockSpec((Bp, Hp), lambda i: (0, 0)),  # resident output
            scratch_shapes=[
                pltpu.VMEM((Tc * Bp, G4), jnp.float32),  # chunk x-projection
                pltpu.VMEM((Bp, Hp), jnp.float32),       # h carry (persistent)
                pltpu.VMEM((Bp, Hp), jnp.float32),       # c carry (persistent)
            ],
        ),
        compiler_params=pltpu.CompilerParams(
            dimension_semantics=("arbitrary",),   # serial recurrence over time
            vmem_limit_bytes=vmem_limit,
        ),
    )(x_flat, wih_pad, whh_pad, bias_pad)

    # TODO(synk): on v7x add a leading "parallel" batch-shard grid axis so
    # both TensorCores run independent batch shards of the recurrence, and
    # optionally store xproj_sc in bfloat16 when matmul_dtype is bf16.
    return out[:B, :H]


def _reference_lstm(x, w_ih, w_hh, b_ih, b_hh):
    """Pure-JAX reference matching torch.nn.LSTM semantics."""
    B, T, D = x.shape
    H = w_hh.shape[1]
    bias = b_ih + b_hh

    def step(carry, x_t):
        h, c = carry
        gates = x_t @ w_ih.T + h @ w_hh.T + bias
        i = jax.nn.sigmoid(gates[:, 0 * H:1 * H])
        f = jax.nn.sigmoid(gates[:, 1 * H:2 * H])
        g = jnp.tanh(gates[:, 2 * H:3 * H])
        o = jax.nn.sigmoid(gates[:, 3 * H:4 * H])
        c = f * c + i * g
        h = o * jnp.tanh(c)
        return (h, c), None

    init = (jnp.zeros((B, H), jnp.float32), jnp.zeros((B, H), jnp.float32))
    (h, _), _ = jax.lax.scan(step, init, jnp.transpose(x, (1, 0, 2)))
    return h


if __name__ == "__main__":
    B, T, D, H = 2, 8, 4, 32   # batch, seq, input_dim, hidden_dim

    key = jax.random.PRNGKey(0)
    k_x, k_wi, k_wh, k_bi, k_bh = jax.random.split(key, 5)

    # Same init range as nn.LSTM: U(-1/sqrt(H), 1/sqrt(H)).
    bound = 1.0 / np.sqrt(H)
    w_ih = jax.random.uniform(k_wi, (4 * H, D), jnp.float32, -bound, bound)
    w_hh = jax.random.uniform(k_wh, (4 * H, H), jnp.float32, -bound, bound)
    b_ih = jax.random.uniform(k_bi, (4 * H,), jnp.float32, -bound, bound)
    b_hh = jax.random.uniform(k_bh, (4 * H,), jnp.float32, -bound, bound)

    x = jax.random.normal(k_x, (B, T, D), jnp.float32)

    ref = jax.block_until_ready(_reference_lstm(x, w_ih, w_hh, b_ih, b_hh))

    # Default path: auto-chosen Tc (here Tc == T, single chunk).
    out = jax.block_until_ready(
        sensor_encoder_forward(x, w_ih, w_hh, b_ih, b_hh))
    np.testing.assert_allclose(np.asarray(out), np.asarray(ref),
                               rtol=1e-4, atol=1e-5)

    # Multi-chunk path (3 chunks of Tc=3 over T=8 with time-pad masking):
    # exercises the persistent h/c carry across grid steps.
    out_chunked = jax.block_until_ready(
        sensor_encoder_forward(x, w_ih, w_hh, b_ih, b_hh, time_chunk=3))
    np.testing.assert_allclose(np.asarray(out_chunked), np.asarray(ref),
                               rtol=1e-4, atol=1e-5)

    print("KERNEL_OK")
</pallas_src>

<mosaic_0001>
module attributes {stable_mosaic.version = 11 : i64} {
  func.func @kernel(%arg0: i32, %arg1: memref<64x4xf32, #tpu.memory_space<vmem>>, %arg2: memref<4x512xf32, #tpu.memory_space<vmem>>, %arg3: memref<128x512xf32, #tpu.memory_space<vmem>>, %arg4: memref<1x512xf32, #tpu.memory_space<vmem>>, %arg5: memref<8x128xf32, #tpu.memory_space<vmem>>, %arg6: memref<64x512xf32, #tpu.memory_space<vmem>>, %arg7: memref<8x128xf32, #tpu.memory_space<vmem>>, %arg8: memref<8x128xf32, #tpu.memory_space<vmem>>) attributes {dimension_semantics = [#tpu.dimension_semantics<arbitrary>], iteration_bounds = array<i64: 1>, scalar_prefetch = 0 : i64, scratch_operands = 3 : i64, tpu.core_type = #tpu.core_type<tc>, window_params = [{transform_indices = @transform_0, window_bounds = array<i64: 64, 4>}, {pipeline_mode = #tpu.pipeline_mode<synchronous>, transform_indices = @transform_1, window_bounds = array<i64: 4, 512>}, {pipeline_mode = #tpu.pipeline_mode<synchronous>, transform_indices = @transform_2, window_bounds = array<i64: 128, 512>}, {pipeline_mode = #tpu.pipeline_mode<synchronous>, transform_indices = @transform_3, window_bounds = array<i64: 1, 512>}, {pipeline_mode = #tpu.pipeline_mode<synchronous>, transform_indices = @transform_4, window_bounds = array<i64: 8, 128>}]} {
    %c0_i32 = arith.constant 0 : i32
    %0 = arith.cmpi eq, %arg0, %c0_i32 : i32
    %1 = arith.extui %0 : i1 to i32
    %c0_i32_0 = arith.constant 0 : i32
    %2 = arith.cmpi ne, %1, %c0_i32_0 : i32
    scf.if %2 {
      %cst_83 = arith.constant 0.000000e+00 : f32
      %273 = vector.broadcast %cst_83 : f32 to vector<8x128xf32>
      %c0_84 = arith.constant 0 : index
      %c0_85 = arith.constant 0 : index
      %274 = vector.load %arg7[%c0_84, %c0_85] : memref<8x128xf32, #tpu.memory_space<vmem>>, vector<8x128xf32>
      tpu.vector_store %arg7[%c0_84, %c0_85], %273 {strides = array<i32>} : memref<8x128xf32, #tpu.memory_space<vmem>>, vector<8x128xf32>,
      %cst_86 = arith.constant 0.000000e+00 : f32
      %275 = vector.broadcast %cst_86 : f32 to vector<8x128xf32>
      %c0_87 = arith.constant 0 : index
      %c0_88 = arith.constant 0 : index
      %276 = vector.load %arg8[%c0_87, %c0_88] : memref<8x128xf32, #tpu.memory_space<vmem>>, vector<8x128xf32>
      tpu.vector_store %arg8[%c0_87, %c0_88], %275 {strides = array<i32>} : memref<8x128xf32, #tpu.memory_space<vmem>>, vector<8x128xf32>,
    } else {
    }
    %c0 = arith.constant 0 : index
    %c0_1 = arith.constant 0 : index
    %3 = vector.load %arg1[%c0, %c0_1] : memref<64x4xf32, #tpu.memory_space<vmem>>, vector<64x4xf32>
    %c0_2 = arith.constant 0 : index
    %c0_3 = arith.constant 0 : index
    %4 = vector.load %arg2[%c0_2, %c0_3] : memref<4x512xf32, #tpu.memory_space<vmem>>, vector<4x512xf32>
    %cst = arith.constant dense<0.000000e+00> : vector<64x512xf32>
    %5 = tpu.matmul %3, %4, %cst {dimension_numbers = #tpu.dot_dimension_numbers<[1], [0], [0], [1], [0, 0, 1, 1], [], []>} : vector<64x4xf32>, vector<4x512xf32>, vector<64x512xf32> -> vector<64x512xf32>
    %c0_4 = arith.constant 0 : index
    %c0_5 = arith.constant 0 : index
    %6 = vector.load %arg4[%c0_4, %c0_5] : memref<1x512xf32, #tpu.memory_space<vmem>>, vector<1x512xf32>
    %7 = vector.broadcast %6 : vector<1x512xf32> to vector<64x512xf32>
    %8 = arith.addf %5, %7 : vector<64x512xf32>
    %c0_6 = arith.constant 0 : index
    %c0_7 = arith.constant 0 : index
    %9 = vector.load %arg6[%c0_6, %c0_7] : memref<64x512xf32, #tpu.memory_space<vmem>>, vector<64x512xf32>
    tpu.vector_store %arg6[%c0_6, %c0_7], %8 {strides = array<i32>} : memref<64x512xf32, #tpu.memory_space<vmem>>, vector<64x512xf32>,
    %c0_8 = arith.constant 0 : index
    %c0_9 = arith.constant 0 : index
    %10 = vector.load %arg7[%c0_8, %c0_9] : memref<8x128xf32, #tpu.memory_space<vmem>>, vector<8x128xf32>
    %c0_10 = arith.constant 0 : index
    %c0_11 = arith.constant 0 : index
    %11 = vector.load %arg8[%c0_10, %c0_11] : memref<8x128xf32, #tpu.memory_space<vmem>>, vector<8x128xf32>
    %c0_i32_12 = arith.constant 0 : i32
    %c8_i32 = arith.constant 8 : i32
    %12 = arith.muli %c0_i32_12, %c8_i32 : i32
    %13 = tpu.assume_multiple %12, 8 : i32
    %14 = arith.index_cast %13 : i32 to index
    %c0_13 = arith.constant 0 : index
    %15 = vector.load %arg6[%14, %c0_13] : memref<64x512xf32, #tpu.memory_space<vmem>>, vector<8x512xf32>
    %c0_14 = arith.constant 0 : index
    %c0_15 = arith.constant 0 : index
    %16 = vector.load %arg3[%c0_14, %c0_15] : memref<128x512xf32, #tpu.memory_space<vmem>>, vector<128x512xf32>
    %cst_16 = arith.constant dense<0.000000e+00> : vector<8x512xf32>
    %17 = tpu.matmul %10, %16, %cst_16 {dimension_numbers = #tpu.dot_dimension_numbers<[1], [0], [0], [1], [0, 0, 1, 1], [], []>} : vector<8x128xf32>, vector<128x512xf32>, vector<8x512xf32> -> vector<8x512xf32>
    %18 = arith.addf %15, %17 : vector<8x512xf32>
    %19 = vector.extract_strided_slice %18 {offsets = [0, 0], sizes = [8, 128], strides = [1, 1]} : vector<8x512xf32> to vector<8x128xf32>
    %20 = arith.negf %19 : vector<8x128xf32>
    %21 = math.exp %20 : vector<8x128xf32>
    %cst_17 = arith.constant 1.000000e+00 : f32
    %22 = vector.broadcast %cst_17 : f32 to vector<8x128xf32>
    %23 = arith.addf %22, %21 : vector<8x128xf32>
    %24 = arith.divf %22, %23 : vector<8x128xf32>
    %25 = vector.extract_strided_slice %18 {offsets = [0, 128], sizes = [8, 128], strides = [1, 1]} : vector<8x512xf32> to vector<8x128xf32>
    %26 = arith.negf %25 : vector<8x128xf32>
    %27 = math.exp %26 : vector<8x128xf32>
    %cst_18 = arith.constant 1.000000e+00 : f32
    %28 = vector.broadcast %cst_18 : f32 to vector<8x128xf32>
    %29 = arith.addf %28, %27 : vector<8x128xf32>
    %30 = arith.divf %28, %29 : vector<8x128xf32>
    %31 = vector.extract_strided_slice %18 {offsets = [0, 256], sizes = [8, 128], strides = [1, 1]} : vector<8x512xf32> to vector<8x128xf32>
    %32 = math.tanh %31 : vector<8x128xf32>
    %33 = vector.extract_strided_slice %18 {offsets = [0, 384], sizes = [8, 128], strides = [1, 1]} : vector<8x512xf32> to vector<8x128xf32>
    %34 = arith.negf %33 : vector<8x128xf32>
    %35 = math.exp %34 : vector<8x128xf32>
    %cst_19 = arith.constant 1.000000e+00 : f32
    %36 = vector.broadcast %cst_19 : f32 to vector<8x128xf32>
    %37 = arith.addf %36, %35 : vector<8x128xf32>
    %38 = arith.divf %36, %37 : vector<8x128xf32>
    %39 = arith.mulf %30, %11 : vector<8x128xf32>
    %40 = arith.mulf %24, %32 : vector<8x128xf32>
    %41 = arith.addf %39, %40 : vector<8x128xf32>
    %42 = math.tanh %41 : vector<8x128xf32>
    %43 = arith.mulf %38, %42 : vector<8x128xf32>
    %c1_i32 = arith.constant 1 : i32
    %c8_i32_20 = arith.constant 8 : i32
    %44 = arith.muli %c1_i32, %c8_i32_20 : i32
    %45 = tpu.assume_multiple %44, 8 : i32
    %46 = arith.index_cast %45 : i32 to index
    %c0_21 = arith.constant 0 : index
    %47 = vector.load %arg6[%46, %c0_21] : memref<64x512xf32, #tpu.memory_space<vmem>>, vector<8x512xf32>
    %c0_22 = arith.constant 0 : index
    %c0_23 = arith.constant 0 : index
    %48 = vector.load %arg3[%c0_22, %c0_23] : memref<128x512xf32, #tpu.memory_space<vmem>>, vector<128x512xf32>
    %cst_24 = arith.constant dense<0.000000e+00> : vector<8x512xf32>
    %49 = tpu.matmul %43, %48, %cst_24 {dimension_numbers = #tpu.dot_dimension_numbers<[1], [0], [0], [1], [0, 0, 1, 1], [], []>} : vector<8x128xf32>, vector<128x512xf32>, vector<8x512xf32> -> vector<8x512xf32>
    %50 = arith.addf %47, %49 : vector<8x512xf32>
    %51 = vector.extract_strided_slice %50 {offsets = [0, 0], sizes = [8, 128], strides = [1, 1]} : vector<8x512xf32> to vector<8x128xf32>
    %52 = arith.negf %51 : vector<8x128xf32>
    %53 = math.exp %52 : vector<8x128xf32>
    %cst_25 = arith.constant 1.000000e+00 : f32
    %54 = vector.broadcast %cst_25 : f32 to vector<8x128xf32>
    %55 = arith.addf %54, %53 : vector<8x128xf32>
    %56 = arith.divf %54, %55 : vector<8x128xf32>
    %57 = vector.extract_strided_slice %50 {offsets = [0, 128], sizes = [8, 128], strides = [1, 1]} : vector<8x512xf32> to vector<8x128xf32>
    %58 = arith.negf %57 : vector<8x128xf32>
    %59 = math.exp %58 : vector<8x128xf32>
    %cst_26 = arith.constant 1.000000e+00 : f32
    %60 = vector.broadcast %cst_26 : f32 to vector<8x128xf32>
    %61 = arith.addf %60, %59 : vector<8x128xf32>
    %62 = arith.divf %60, %61 : vector<8x128xf32>
    %63 = vector.extract_strided_slice %50 {offsets = [0, 256], sizes = [8, 128], strides = [1, 1]} : vector<8x512xf32> to vector<8x128xf32>
    %64 = math.tanh %63 : vector<8x128xf32>
    %65 = vector.extract_strided_slice %50 {offsets = [0, 384], sizes = [8, 128], strides = [1, 1]} : vector<8x512xf32> to vector<8x128xf32>
    %66 = arith.negf %65 : vector<8x128xf32>
    %67 = math.exp %66 : vector<8x128xf32>
    %cst_27 = arith.constant 1.000000e+00 : f32
    %68 = vector.broadcast %cst_27 : f32 to vector<8x128xf32>
    %69 = arith.addf %68, %67 : vector<8x128xf32>
    %70 = arith.divf %68, %69 : vector<8x128xf32>
    %71 = arith.mulf %62, %41 : vector<8x128xf32>
    %72 = arith.mulf %56, %64 : vector<8x128xf32>
    %73 = arith.addf %71, %72 : vector<8x128xf32>
    %74 = math.tanh %73 : vector<8x128xf32>
    %75 = arith.mulf %70, %74 : vector<8x128xf32>
    %c2_i32 = arith.constant 2 : i32
    %c8_i32_28 = arith.constant 8 : i32
    %76 = arith.muli %c2_i32, %c8_i32_28 : i32
    %77 = tpu.assume_multiple %76, 8 : i32
    %78 = arith.index_cast %77 : i32 to index
    %c0_29 = arith.constant 0 : index
    %79 = vector.load %arg6[%78, %c0_29] : memref<64x512xf32, #tpu.memory_space<vmem>>, vector<8x512xf32>
    %c0_30 = arith.constant 0 : index
    %c0_31 = arith.constant 0 : index
    %80 = vector.load %arg3[%c0_30, %c0_31] : memref<128x512xf32, #tpu.memory_space<vmem>>, vector<128x512xf32>
    %cst_32 = arith.constant dense<0.000000e+00> : vector<8x512xf32>
    %81 = tpu.matmul %75, %80, %cst_32 {dimension_numbers = #tpu.dot_dimension_numbers<[1], [0], [0], [1], [0, 0, 1, 1], [], []>} : vector<8x128xf32>, vector<128x512xf32>, vector<8x512xf32> -> vector<8x512xf32>
    %82 = arith.addf %79, %81 : vector<8x512xf32>
    %83 = vector.extract_strided_slice %82 {offsets = [0, 0], sizes = [8, 128], strides = [1, 1]} : vector<8x512xf32> to vector<8x128xf32>
    %84 = arith.negf %83 : vector<8x128xf32>
    %85 = math.exp %84 : vector<8x128xf32>
    %cst_33 = arith.constant 1.000000e+00 : f32
    %86 = vector.broadcast %cst_33 : f32 to vector<8x128xf32>
    %87 = arith.addf %86, %85 : vector<8x128xf32>
    %88 = arith.divf %86, %87 : vector<8x128xf32>
    %89 = vector.extract_strided_slice %82 {offsets = [0, 128], sizes = [8, 128], strides = [1, 1]} : vector<8x512xf32> to vector<8x128xf32>
    %90 = arith.negf %89 : vector<8x128xf32>
    %91 = math.exp %90 : vector<8x128xf32>
    %cst_34 = arith.constant 1.000000e+00 : f32
    %92 = vector.broadcast %cst_34 : f32 to vector<8x128xf32>
    %93 = arith.addf %92, %91 : vector<8x128xf32>
    %94 = arith.divf %92, %93 : vector<8x128xf32>
    %95 = vector.extract_strided_slice %82 {offsets = [0, 256], sizes = [8, 128], strides = [1, 1]} : vector<8x512xf32> to vector<8x128xf32>
    %96 = math.tanh %95 : vector<8x128xf32>
    %97 = vector.extract_strided_slice %82 {offsets = [0, 384], sizes = [8, 128], strides = [1, 1]} : vector<8x512xf32> to vector<8x128xf32>
    %98 = arith.negf %97 : vector<8x128xf32>
    %99 = math.exp %98 : vector<8x128xf32>
    %cst_35 = arith.constant 1.000000e+00 : f32
    %100 = vector.broadcast %cst_35 : f32 to vector<8x128xf32>
    %101 = arith.addf %100, %99 : vector<8x128xf32>
    %102 = arith.divf %100, %101 : vector<8x128xf32>
    %103 = arith.mulf %94, %73 : vector<8x128xf32>
    %104 = arith.mulf %88, %96 : vector<8x128xf32>
    %105 = arith.addf %103, %104 : vector<8x128xf32>
    %106 = math.tanh %105 : vector<8x128xf32>
    %107 = arith.mulf %102, %106 : vector<8x128xf32>
    %c3_i32 = arith.constant 3 : i32
    %c8_i32_36 = arith.constant 8 : i32
    %108 = arith.muli %c3_i32, %c8_i32_36 : i32
    %109 = tpu.assume_multiple %108, 8 : i32
    %110 = arith.index_cast %109 : i32 to index
    %c0_37 = arith.constant 0 : index
    %111 = vector.load %arg6[%110, %c0_37] : memref<64x512xf32, #tpu.memory_space<vmem>>, vector<8x512xf32>
    %c0_38 = arith.constant 0 : index
    %c0_39 = arith.constant 0 : index
    %112 = vector.load %arg3[%c0_38, %c0_39] : memref<128x512xf32, #tpu.memory_space<vmem>>, vector<128x512xf32>
    %cst_40 = arith.constant dense<0.000000e+00> : vector<8x512xf32>
    %113 = tpu.matmul %107, %112, %cst_40 {dimension_numbers = #tpu.dot_dimension_numbers<[1], [0], [0], [1], [0, 0, 1, 1], [], []>} : vector<8x128xf32>, vector<128x512xf32>, vector<8x512xf32> -> vector<8x512xf32>
    %114 = arith.addf %111, %113 : vector<8x512xf32>
    %115 = vector.extract_strided_slice %114 {offsets = [0, 0], sizes = [8, 128], strides = [1, 1]} : vector<8x512xf32> to vector<8x128xf32>
    %116 = arith.negf %115 : vector<8x128xf32>
    %117 = math.exp %116 : vector<8x128xf32>
    %cst_41 = arith.constant 1.000000e+00 : f32
    %118 = vector.broadcast %cst_41 : f32 to vector<8x128xf32>
    %119 = arith.addf %118, %117 : vector<8x128xf32>
    %120 = arith.divf %118, %119 : vector<8x128xf32>
    %121 = vector.extract_strided_slice %114 {offsets = [0, 128], sizes = [8, 128], strides = [1, 1]} : vector<8x512xf32> to vector<8x128xf32>
    %122 = arith.negf %121 : vector<8x128xf32>
    %123 = math.exp %122 : vector<8x128xf32>
    %cst_42 = arith.constant 1.000000e+00 : f32
    %124 = vector.broadcast %cst_42 : f32 to vector<8x128xf32>
    %125 = arith.addf %124, %123 : vector<8x128xf32>
    %126 = arith.divf %124, %125 : vector<8x128xf32>
    %127 = vector.extract_strided_slice %114 {offsets = [0, 256], sizes = [8, 128], strides = [1, 1]} : vector<8x512xf32> to vector<8x128xf32>
    %128 = math.tanh %127 : vector<8x128xf32>
    %129 = vector.extract_strided_slice %114 {offsets = [0, 384], sizes = [8, 128], strides = [1, 1]} : vector<8x512xf32> to vector<8x128xf32>
    %130 = arith.negf %129 : vector<8x128xf32>
    %131 = math.exp %130 : vector<8x128xf32>
    %cst_43 = arith.constant 1.000000e+00 : f32
    %132 = vector.broadcast %cst_43 : f32 to vector<8x128xf32>
    %133 = arith.addf %132, %131 : vector<8x128xf32>
    %134 = arith.divf %132, %133 : vector<8x128xf32>
    %135 = arith.mulf %126, %105 : vector<8x128xf32>
    %136 = arith.mulf %120, %128 : vector<8x128xf32>
    %137 = arith.addf %135, %136 : vector<8x128xf32>
    %138 = math.tanh %137 : vector<8x128xf32>
    %139 = arith.mulf %134, %138 : vector<8x128xf32>
    %c4_i32 = arith.constant 4 : i32
    %c8_i32_44 = arith.constant 8 : i32
    %140 = arith.muli %c4_i32, %c8_i32_44 : i32
    %141 = tpu.assume_multiple %140, 8 : i32
    %142 = arith.index_cast %141 : i32 to index
    %c0_45 = arith.constant 0 : index
    %143 = vector.load %arg6[%142, %c0_45] : memref<64x512xf32, #tpu.memory_space<vmem>>, vector<8x512xf32>
    %c0_46 = arith.constant 0 : index
    %c0_47 = arith.constant 0 : index
    %144 = vector.load %arg3[%c0_46, %c0_47] : memref<128x512xf32, #tpu.memory_space<vmem>>, vector<128x512xf32>
    %cst_48 = arith.constant dense<0.000000e+00> : vector<8x512xf32>
    %145 = tpu.matmul %139, %144, %cst_48 {dimension_numbers = #tpu.dot_dimension_numbers<[1], [0], [0], [1], [0, 0, 1, 1], [], []>} : vector<8x128xf32>, vector<128x512xf32>, vector<8x512xf32> -> vector<8x512xf32>
    %146 = arith.addf %143, %145 : vector<8x512xf32>
    %147 = vector.extract_strided_slice %146 {offsets = [0, 0], sizes = [8, 128], strides = [1, 1]} : vector<8x512xf32> to vector<8x128xf32>
    %148 = arith.negf %147 : vector<8x128xf32>
    %149 = math.exp %148 : vector<8x128xf32>
    %cst_49 = arith.constant 1.000000e+00 : f32
    %150 = vector.broadcast %cst_49 : f32 to vector<8x128xf32>
    %151 = arith.addf %150, %149 : vector<8x128xf32>
    %152 = arith.divf %150, %151 : vector<8x128xf32>
    %153 = vector.extract_strided_slice %146 {offsets = [0, 128], sizes = [8, 128], strides = [1, 1]} : vector<8x512xf32> to vector<8x128xf32>
    %154 = arith.negf %153 : vector<8x128xf32>
    %155 = math.exp %154 : vector<8x128xf32>
    %cst_50 = arith.constant 1.000000e+00 : f32
    %156 = vector.broadcast %cst_50 : f32 to vector<8x128xf32>
    %157 = arith.addf %156, %155 : vector<8x128xf32>
    %158 = arith.divf %156, %157 : vector<8x128xf32>
    %159 = vector.extract_strided_slice %146 {offsets = [0, 256], sizes = [8, 128], strides = [1, 1]} : vector<8x512xf32> to vector<8x128xf32>
    %160 = math.tanh %159 : vector<8x128xf32>
    %161 = vector.extract_strided_slice %146 {offsets = [0, 384], sizes = [8, 128], strides = [1, 1]} : vector<8x512xf32> to vector<8x128xf32>
    %162 = arith.negf %161 : vector<8x128xf32>
    %163 = math.exp %162 : vector<8x128xf32>
    %cst_51 = arith.constant 1.000000e+00 : f32
    %164 = vector.broadcast %cst_51 : f32 to vector<8x128xf32>
    %165 = arith.addf %164, %163 : vector<8x128xf32>
    %166 = arith.divf %164, %165 : vector<8x128xf32>
    %167 = arith.mulf %158, %137 : vector<8x128xf32>
    %168 = arith.mulf %152, %160 : vector<8x128xf32>
    %169 = arith.addf %167, %168 : vector<8x128xf32>
    %170 = math.tanh %169 : vector<8x128xf32>
    %171 = arith.mulf %166, %170 : vector<8x128xf32>
    %c5_i32 = arith.constant 5 : i32
    %c8_i32_52 = arith.constant 8 : i32
    %172 = arith.muli %c5_i32, %c8_i32_52 : i32
    %173 = tpu.assume_multiple %172, 8 : i32
    %174 = arith.index_cast %173 : i32 to index
    %c0_53 = arith.constant 0 : index
    %175 = vector.load %arg6[%174, %c0_53] : memref<64x512xf32, #tpu.memory_space<vmem>>, vector<8x512xf32>
    %c0_54 = arith.constant 0 : index
    %c0_55 = arith.constant 0 : index
    %176 = vector.load %arg3[%c0_54, %c0_55] : memref<128x512xf32, #tpu.memory_space<vmem>>, vector<128x512xf32>
    %cst_56 = arith.constant dense<0.000000e+00> : vector<8x512xf32>
    %177 = tpu.matmul %171, %176, %cst_56 {dimension_numbers = #tpu.dot_dimension_numbers<[1], [0], [0], [1], [0, 0, 1, 1], [], []>} : vector<8x128xf32>, vector<128x512xf32>, vector<8x512xf32> -> vector<8x512xf32>
    %178 = arith.addf %175, %177 : vector<8x512xf32>
    %179 = vector.extract_strided_slice %178 {offsets = [0, 0], sizes = [8, 128], strides = [1, 1]} : vector<8x512xf32> to vector<8x128xf32>
    %180 = arith.negf %179 : vector<8x128xf32>
    %181 = math.exp %180 : vector<8x128xf32>
    %cst_57 = arith.constant 1.000000e+00 : f32
    %182 = vector.broadcast %cst_57 : f32 to vector<8x128xf32>
    %183 = arith.addf %182, %181 : vector<8x128xf32>
    %184 = arith.divf %182, %183 : vector<8x128xf32>
    %185 = vector.extract_strided_slice %178 {offsets = [0, 128], sizes = [8, 128], strides = [1, 1]} : vector<8x512xf32> to vector<8x128xf32>
    %186 = arith.negf %185 : vector<8x128xf32>
    %187 = math.exp %186 : vector<8x128xf32>
    %cst_58 = arith.constant 1.000000e+00 : f32
    %188 = vector.broadcast %cst_58 : f32 to vector<8x128xf32>
    %189 = arith.addf %188, %187 : vector<8x128xf32>
    %190 = arith.divf %188, %189 : vector<8x128xf32>
    %191 = vector.extract_strided_slice %178 {offsets = [0, 256], sizes = [8, 128], strides = [1, 1]} : vector<8x512xf32> to vector<8x128xf32>
    %192 = math.tanh %191 : vector<8x128xf32>
    %193 = vector.extract_strided_slice %178 {offsets = [0, 384], sizes = [8, 128], strides = [1, 1]} : vector<8x512xf32> to vector<8x128xf32>
    %194 = arith.negf %193 : vector<8x128xf32>
    %195 = math.exp %194 : vector<8x128xf32>
    %cst_59 = arith.constant 1.000000e+00 : f32
    %196 = vector.broadcast %cst_59 : f32 to vector<8x128xf32>
    %197 = arith.addf %196, %195 : vector<8x128xf32>
    %198 = arith.divf %196, %197 : vector<8x128xf32>
    %199 = arith.mulf %190, %169 : vector<8x128xf32>
    %200 = arith.mulf %184, %192 : vector<8x128xf32>
    %201 = arith.addf %199, %200 : vector<8x128xf32>
    %202 = math.tanh %201 : vector<8x128xf32>
    %203 = arith.mulf %198, %202 : vector<8x128xf32>
    %c6_i32 = arith.constant 6 : i32
    %c8_i32_60 = arith.constant 8 : i32
    %204 = arith.muli %c6_i32, %c8_i32_60 : i32
    %205 = tpu.assume_multiple %204, 8 : i32
    %206 = arith.index_cast %205 : i32 to index
    %c0_61 = arith.constant 0 : index
    %207 = vector.load %arg6[%206, %c0_61] : memref<64x512xf32, #tpu.memory_space<vmem>>, vector<8x512xf32>
    %c0_62 = arith.constant 0 : index
    %c0_63 = arith.constant 0 : index
    %208 = vector.load %arg3[%c0_62, %c0_63] : memref<128x512xf32, #tpu.memory_space<vmem>>, vector<128x512xf32>
    %cst_64 = arith.constant dense<0.000000e+00> : vector<8x512xf32>
    %209 = tpu.matmul %203, %208, %cst_64 {dimension_numbers = #tpu.dot_dimension_numbers<[1], [0], [0], [1], [0, 0, 1, 1], [], []>} : vector<8x128xf32>, vector<128x512xf32>, vector<8x512xf32> -> vector<8x512xf32>
    %210 = arith.addf %207, %209 : vector<8x512xf32>
    %211 = vector.extract_strided_slice %210 {offsets = [0, 0], sizes = [8, 128], strides = [1, 1]} : vector<8x512xf32> to vector<8x128xf32>
    %212 = arith.negf %211 : vector<8x128xf32>
    %213 = math.exp %212 : vector<8x128xf32>
    %cst_65 = arith.constant 1.000000e+00 : f32
    %214 = vector.broadcast %cst_65 : f32 to vector<8x128xf32>
    %215 = arith.addf %214, %213 : vector<8x128xf32>
    %216 = arith.divf %214, %215 : vector<8x128xf32>
    %217 = vector.extract_strided_slice %210 {offsets = [0, 128], sizes = [8, 128], strides = [1, 1]} : vector<8x512xf32> to vector<8x128xf32>
    %218 = arith.negf %217 : vector<8x128xf32>
    %219 = math.exp %218 : vector<8x128xf32>
    %cst_66 = arith.constant 1.000000e+00 : f32
    %220 = vector.broadcast %cst_66 : f32 to vector<8x128xf32>
    %221 = arith.addf %220, %219 : vector<8x128xf32>
    %222 = arith.divf %220, %221 : vector<8x128xf32>
    %223 = vector.extract_strided_slice %210 {offsets = [0, 256], sizes = [8, 128], strides = [1, 1]} : vector<8x512xf32> to vector<8x128xf32>
    %224 = math.tanh %223 : vector<8x128xf32>
    %225 = vector.extract_strided_slice %210 {offsets = [0, 384], sizes = [8, 128], strides = [1, 1]} : vector<8x512xf32> to vector<8x128xf32>
    %226 = arith.negf %225 : vector<8x128xf32>
    %227 = math.exp %226 : vector<8x128xf32>
    %cst_67 = arith.constant 1.000000e+00 : f32
    %228 = vector.broadcast %cst_67 : f32 to vector<8x128xf32>
    %229 = arith.addf %228, %227 : vector<8x128xf32>
    %230 = arith.divf %228, %229 : vector<8x128xf32>
    %231 = arith.mulf %222, %201 : vector<8x128xf32>
    %232 = arith.mulf %216, %224 : vector<8x128xf32>
    %233 = arith.addf %231, %232 : vector<8x128xf32>
    %234 = math.tanh %233 : vector<8x128xf32>
    %235 = arith.mulf %230, %234 : vector<8x128xf32>
    %c7_i32 = arith.constant 7 : i32
    %c8_i32_68 = arith.constant 8 : i32
    %236 = arith.muli %c7_i32, %c8_i32_68 : i32
    %237 = tpu.assume_multiple %236, 8 : i32
    %238 = arith.index_cast %237 : i32 to index
    %c0_69 = arith.constant 0 : index
    %239 = vector.load %arg6[%238, %c0_69] : memref<64x512xf32, #tpu.memory_space<vmem>>, vector<8x512xf32>
    %c0_70 = arith.constant 0 : index
    %c0_71 = arith.constant 0 : index
    %240 = vector.load %arg3[%c0_70, %c0_71] : memref<128x512xf32, #tpu.memory_space<vmem>>, vector<128x512xf32>
    %cst_72 = arith.constant dense<0.000000e+00> : vector<8x512xf32>
    %241 = tpu.matmul %235, %240, %cst_72 {dimension_numbers = #tpu.dot_dimension_numbers<[1], [0], [0], [1], [0, 0, 1, 1], [], []>} : vector<8x128xf32>, vector<128x512xf32>, vector<8x512xf32> -> vector<8x512xf32>
    %242 = arith.addf %239, %241 : vector<8x512xf32>
    %243 = vector.extract_strided_slice %242 {offsets = [0, 0], sizes = [8, 128], strides = [1, 1]} : vector<8x512xf32> to vector<8x128xf32>
    %244 = arith.negf %243 : vector<8x128xf32>
    %245 = math.exp %244 : vector<8x128xf32>
    %cst_73 = arith.constant 1.000000e+00 : f32
    %246 = vector.broadcast %cst_73 : f32 to vector<8x128xf32>
    %247 = arith.addf %246, %245 : vector<8x128xf32>
    %248 = arith.divf %246, %247 : vector<8x128xf32>
    %249 = vector.extract_strided_slice %242 {offsets = [0, 128], sizes = [8, 128], strides = [1, 1]} : vector<8x512xf32> to vector<8x128xf32>
    %250 = arith.negf %249 : vector<8x128xf32>
    %251 = math.exp %250 : vector<8x128xf32>
    %cst_74 = arith.constant 1.000000e+00 : f32
    %252 = vector.broadcast %cst_74 : f32 to vector<8x128xf32>
    %253 = arith.addf %252, %251 : vector<8x128xf32>
    %254 = arith.divf %252, %253 : vector<8x128xf32>
    %255 = vector.extract_strided_slice %242 {offsets = [0, 256], sizes = [8, 128], strides = [1, 1]} : vector<8x512xf32> to vector<8x128xf32>
    %256 = math.tanh %255 : vector<8x128xf32>
    %257 = vector.extract_strided_slice %242 {offsets = [0, 384], sizes = [8, 128], strides = [1, 1]} : vector<8x512xf32> to vector<8x128xf32>
    %258 = arith.negf %257 : vector<8x128xf32>
    %259 = math.exp %258 : vector<8x128xf32>
    %cst_75 = arith.constant 1.000000e+00 : f32
    %260 = vector.broadcast %cst_75 : f32 to vector<8x128xf32>
    %261 = arith.addf %260, %259 : vector<8x128xf32>
    %262 = arith.divf %260, %261 : vector<8x128xf32>
    %263 = arith.mulf %254, %233 : vector<8x128xf32>
    %264 = arith.mulf %248, %256 : vector<8x128xf32>
    %265 = arith.addf %263, %264 : vector<8x128xf32>
    %266 = math.tanh %265 : vector<8x128xf32>
    %267 = arith.mulf %262, %266 : vector<8x128xf32>
    %c8_i32_76 = arith.constant 8 : i32
    %c0_77 = arith.constant 0 : index
    %c0_78 = arith.constant 0 : index
    %268 = vector.load %arg7[%c0_77, %c0_78] : memref<8x128xf32, #tpu.memory_space<vmem>>, vector<8x128xf32>
    tpu.vector_store %arg7[%c0_77, %c0_78], %267 {strides = array<i32>} : memref<8x128xf32, #tpu.memory_space<vmem>>, vector<8x128xf32>,
    %c0_79 = arith.constant 0 : index
    %c0_80 = arith.constant 0 : index
    %269 = vector.load %arg8[%c0_79, %c0_80] : memref<8x128xf32, #tpu.memory_space<vmem>>, vector<8x128xf32>
    tpu.vector_store %arg8[%c0_79, %c0_80], %265 {strides = array<i32>} : memref<8x128xf32, #tpu.memory_space<vmem>>, vector<8x128xf32>,
    %c0_i32_81 = arith.constant 0 : i32
    %270 = arith.cmpi eq, %arg0, %c0_i32_81 : i32
    %271 = arith.extui %270 : i1 to i32
    %c0_i32_82 = arith.constant 0 : i32
    %272 = arith.cmpi ne, %271, %c0_i32_82 : i32
    scf.if %272 {
      %c0_83 = arith.constant 0 : index
      %c0_84 = arith.constant 0 : index
      %273 = vector.load %arg5[%c0_83, %c0_84] : memref<8x128xf32, #tpu.memory_space<vmem>>, vector<8x128xf32>
      tpu.vector_store %arg5[%c0_83, %c0_84], %267 {strides = array<i32>} : memref<8x128xf32, #tpu.memory_space<vmem>>, vector<8x128xf32>,
    } else {
    }
    return
  }
  func.func @transform_0(%arg0: i32) -> (i32, i32) {
    %c0_i32 = arith.constant 0 : i32
    %c0_i32_0 = arith.constant 0 : i32
    return %arg0, %c0_i32 : i32, i32
  }
  func.func @transform_1(%arg0: i32) -> (i32, i32) {
    %c0_i32 = arith.constant 0 : i32
    %c0_i32_0 = arith.constant 0 : i32
    %c0_i32_1 = arith.constant 0 : i32
    return %c0_i32, %c0_i32_0 : i32, i32
  }
  func.func @transform_2(%arg0: i32) -> (i32, i32) {
    %c0_i32 = arith.constant 0 : i32
    %c0_i32_0 = arith.constant 0 : i32
    %c0_i32_1 = arith.constant 0 : i32
    return %c0_i32, %c0_i32_0 : i32, i32
  }
  func.func @transform_3(%arg0: i32) -> (i32, i32) {
    %c0_i32 = arith.constant 0 : i32
    %c0_i32_0 = arith.constant 0 : i32
    %c0_i32_1 = arith.constant 0 : i32
    return %c0_i32, %c0_i32_0 : i32, i32
  }
  func.func @transform_4(%arg0: i32) -> (i32, i32) {
    %c0_i32 = arith.constant 0 : i32
    %c0_i32_0 = arith.constant 0 : i32
    %c0_i32_1 = arith.constant 0 : i32
    return %c0_i32, %c0_i32_0 : i32, i32
  }
}

</mosaic_0001>

<llo_original>
// kernel: tpu_custom_call.1
$region0: #{tpu_custom_call.1}
  #allocation0 [shape = 'u32[]', space=smem, size = 0x4, offset = 0x4, fixed_abs, tag = 'smem constant byte address 0x4 - core index']
  #allocation1 [shape = 'u32[144,128]{1,0:T(1,128)}', space=vmem, size = 0x12000, scoped, tag = 'internal scratch']
  #allocation2 [shape = 'f32[64,512]{1,0:T(8,128)}', space=vmem, size = 0x20000, scoped, tag = 'scratch operand']
  #allocation3 [shape = 'f32[8,128]{1,0:T(8,128)}', space=vmem, size = 0x1000, scoped, tag = 'scratch operand']
  #allocation4 [shape = 'f32[8,128]{1,0:T(8,128)}', space=vmem, size = 0x1000, scoped, tag = 'scratch operand']
  %s0 = inlined_call_operand.vmem [shape: f32[64,4], index: 0, kind: input, shape index: {}]
  %s1 = inlined_call_operand.vmem [shape: f32[4,512], index: 1, kind: input, shape index: {}]
  %s2 = inlined_call_operand.hbm [shape: f32[128,512], index: 2, kind: input, shape index: {}]
  %s3 = inlined_call_operand.vmem [shape: f32[1,512], index: 3, kind: input, shape index: {}]
  %s4 = inlined_call_operand.hbm [shape: f32[8,128], index: 4, kind: output, shape index: {}]
  %s5 = sld [smem:[#allocation0]]
  $region38: #{tpu_custom_call.1} parent=0
    _
  %s7 = ssub.s32 1, %s5
  %s8 = scalar_select 0, %s7, %s5
  $region1: #{tpu_custom_call.1} parent=0
    #allocation5 [shape = 'u8[262144]{0}', space=vmem, size = 0x40000, scoped, tag = 'input window, operand 2, single buffered']
    #allocation6 [shape = 's32[1]{0}', space=sflag, size = 0x4, scoped, tag = 'scoped memory for tpu_custom_call.1']
    #allocation7 [shape = 's32[1]{0}', space=sflag, size = 0x4, scoped, tag = 'scoped memory for tpu_custom_call.1']
    #allocation8 [shape = 'u8[4096]{0}', space=vmem, size = 0x1000, scoped, tag = 'output window, operand 0, single buffered']
    %9 = vsyncpa [#allocation6], 0
    %10 = vsyncpa [#allocation7], 0
    // Predicated region
    $region2: #{tpu_custom_call.1} parent=1 // pred_check
      _
    $region3: #{tpu_custom_call.1} parent=1 // pred_check_branch
      %12 = sbr.rel (0) target = $region5
    $region4: #{tpu_custom_call.1} parent=1 // pred_region
      _
    $region5: #{tpu_custom_call.1} parent=1 // pred_fallthru
      _
    // Predicated region
    $region6: #{tpu_custom_call.1} parent=1 // pred_check
      _
    $region7: #{tpu_custom_call.1} parent=1 // pred_check_branch
      %14 = sbr.rel (0) target = $region9
    $region8: #{tpu_custom_call.1} parent=1 // pred_region
      _
    $region9: #{tpu_custom_call.1} parent=1 // pred_fallthru
      _
    // Predicated region
    $region10: #{tpu_custom_call.1} parent=1 // pred_check
      _
    $region11: #{tpu_custom_call.1} parent=1 // pred_check_branch
      %16 = sbr.rel (0) target = $region13
    $region12: #{tpu_custom_call.1} parent=1 // pred_region
      %s18 = ssub.s32 8192, 8192
      %19 = vsyncadd [#allocation6], %s18
      %s20 = sshll.u32 [#allocation5], 4
      %s21 = int_to_ptr.vmem [resolvable:$true] %s20
      %26 = dma.hbm_to_vmem [thread:$0]  %s2, 8192, %s21, [#allocation6], 512, 512, 32
    $region13: #{tpu_custom_call.1} parent=1 // pred_fallthru
      _
    // Predicated region
    $region14: #{tpu_custom_call.1} parent=1 // pred_check
      _
    $region15: #{tpu_custom_call.1} parent=1 // pred_check_branch
      %28 = sbr.rel (0) target = $region17
    $region16: #{tpu_custom_call.1} parent=1 // pred_region
      _
    $region17: #{tpu_custom_call.1} parent=1 // pred_fallthru
      _
    // Predicated region
    $region18: #{tpu_custom_call.1} parent=1 // pred_check
      _
    $region19: #{tpu_custom_call.1} parent=1 // pred_check_branch
      %30 = sbr.rel (0) target = $region21
    $region20: #{tpu_custom_call.1} parent=1 // pred_region
      %31 = dma.done [#allocation6], 8192
    $region21: #{tpu_custom_call.1} parent=1 // pred_fallthru
      _
    %p32 = scmp.eq.s32.totalorder 0, 0
    // Predicated region
    $region22: #{tpu_custom_call.1} parent=1 // pred_check
      %p33 = pneg %p32
    $region23: #{tpu_custom_call.1} parent=1 // pred_check_branch
      %35 = sbr.rel (%p33) target = $region25
    $region24: #{tpu_custom_call.1} parent=1 // pred_region
      %36 = vst [vmem:[#allocation3] sm:$0xff] 0.0
      %37 = vst [vmem:[#allocation4] sm:$0xff] 0.0
    $region25: #{tpu_custom_call.1} parent=1 // pred_fallthru
      _
    %v38 = vld [vmem:[%s0] sm:$0xff]
    %v39 = vld [vmem:[%s0 + $0x8] sm:$0xff]
    %v40 = vld [vmem:[%s0 + $0x10] sm:$0xff]
    %v41 = vld [vmem:[%s0 + $0x18] sm:$0xff]
    %v42 = vld [vmem:[%s0 + $0x20] sm:$0xff]
    %v43 = vld [vmem:[%s0 + $0x28] sm:$0xff]
    %v44 = vld [vmem:[%s0 + $0x30] sm:$0xff]
    %v45 = vld [vmem:[%s0 + $0x38] sm:$0xff]
    %v46 = vld [vmem:[%s1] sm:$0xff]
    %v47 = vld [vmem:[%s1 + $0x8] sm:$0xff]
    %v48 = vld [vmem:[%s3] sm:$0xf]
    %v50 = vlaneseq
    %v51 = vshrl.u32 %v50, 7
    %v52 = vsub.s32 0, %v51
    %v53 = vrot.slane %v48, %v52
    %v54 = vlaneseq
    %v55 = vshrl.u32 %v54, 7
    %v56 = vsub.s32 1, %v55
    %v57 = vrot.slane %v48, %v56
    %v58 = vlaneseq
    %v59 = vshrl.u32 %v58, 7
    %v60 = vsub.s32 2, %v59
    %v61 = vrot.slane %v48, %v60
    %v62 = vlaneseq
    %v63 = vshrl.u32 %v62, 7
    %v64 = vsub.s32 3, %v63
    %v65 = vrot.slane %v48, %v64
    %v72 = vcombine.high %v46, %v46
    %v73 = vcombine.high %v47, %v47
    %vm74 = vcmask 31744
    %v76 = vsel %vm74, %v38, 0
    %v79 = vsel %vm74, %v39, 0
    %v82 = vsel %vm74, %v40, 0
    %v85 = vsel %vm74, %v41, 0
    %v88 = vsel %vm74, %v42, 0
    %v91 = vsel %vm74, %v43, 0
    %v94 = vsel %vm74, %v44, 0
    %v97 = vsel %vm74, %v45, 0
    %vm99 = vcmask 1043456
    %v100 = vsel %vm99, %v46, 0
    %v102 = vsel %vm99, %v72, 0
    %v104 = vsel %vm99, %v47, 0
    %v106 = vsel %vm99, %v73, 0
    %108 = vmatprep.subr.mxu0 0.0
    %109 = vmatpush1.msra.mxu0 0.0
    %110 = vmatprep.subr.mxu0 0.0
    %111 = vmatpush1.msra.mxu0 0.0
    %112 = vmatprep.subr.mxu0 0.0
    %113 = vmatpush1.msra.mxu0 0.0
    %114 = vmatprep.subr.mxu0 0.0
    %115 = vmatpush1.msra.mxu0 0.0
    %116 = vmatprep.subr.mxu0 0.0
    %117 = vmatpush1.msra.mxu0 0.0
    %118 = vmatprep.subr.mxu0 0.0
    %119 = vmatpush1.msra.mxu0 0.0
    %120 = vmatprep.subr.mxu0 0.0
    %121 = vmatpush1.msra.mxu0 0.0
    %122 = vmatprep.subr.mxu0 0.0
    %123 = vmatpush1.msra.mxu0 0.0
    %124 = vmatprep.subr.mxu0 0.0
    %125 = vmatpush1.msra.mxu0 0.0
    %126 = vmatprep.subr.mxu0 0.0
    %127 = vmatpush1.msra.mxu0 0.0
    %128 = vmatprep.subr.mxu0 0.0
    %129 = vmatpush1.msra.mxu0 0.0
    %130 = vmatprep.subr.mxu0 0.0
    %131 = vmatpush1.msra.mxu0 0.0
    %132 = vmatprep.subr.mxu0 0.0
    %133 = vmatpush1.msra.mxu0 0.0
    %134 = vmatprep.subr.mxu0 0.0
    %135 = vmatpush1.msra.mxu0 0.0
    %136 = vmatprep.subr.mxu0 0.0
    %137 = vmatpush1.msra.mxu0 0.0
    %138 = vmatprep.subr.mxu0 %v102
    %139 = vmatpush1.msra.mxu0 %v100
    %140 = vmatprep.subr.mxu0 0.0
    %141 = vmatpush2.msra.mxu0 0.0
    %142 = vmatprep.subr.mxu0 0.0
    %143 = vmatpush2.msra.mxu0 0.0
    %144 = vmatprep.subr.mxu0 0.0
    %145 = vmatpush2.msra.mxu0 0.0
    %146 = vmatprep.subr.mxu0 0.0
    %147 = vmatpush2.msra.mxu0 0.0
    %148 = vmatprep.subr.mxu0 0.0
    %149 = vmatpush2.msra.mxu0 0.0
    %150 = vmatprep.subr.mxu0 0.0
    %151 = vmatpush2.msra.mxu0 0.0
    %152 = vmatprep.subr.mxu0 0.0
    %153 = vmatpush2.msra.mxu0 0.0
    %154 = vmatprep.subr.mxu0 0.0
    %155 = vmatpush2.msra.mxu0 0.0
    %156 = vmatprep.subr.mxu0 0.0
    %157 = vmatpush2.msra.mxu0 0.0
    %158 = vmatprep.subr.mxu0 0.0
    %159 = vmatpush2.msra.mxu0 0.0
    %160 = vmatprep.subr.mxu0 0.0
    %161 = vmatpush2.msra.mxu0 0.0
    %162 = vmatprep.subr.mxu0 0.0
    %163 = vmatpush2.msra.mxu0 0.0
    %164 = vmatprep.subr.mxu0 0.0
    %165 = vmatpush2.msra.mxu0 0.0
    %166 = vmatprep.subr.mxu0 0.0
    %167 = vmatpush2.msra.mxu0 0.0
    %168 = vmatprep.subr.mxu0 0.0
    %169 = vmatpush2.msra.mxu0 0.0
    %170 = vmatprep.subr.mxu0 0.0
    %171 = vmatpush2.msra.mxu0 0.0
    %172 = vmatprep.mubr.f32.mxu0 0.0
    %173 = vmatmul.mubr.f32.gmra.mxu0 %v76
    %v174 = vpop.f32.mrf.mxu0
    %v175 = vadd.f32 %v53, %v174
    %v176 = vpop.f32.mrf.mxu0
    %v177 = vadd.f32 %v57, %v176
    %178 = vmatprep.mubr.f32.mxu0 0.0
    %179 = vmatmul.mubr.f32.gmra.mxu0 %v79
    %v180 = vpop.f32.mrf.mxu0
    %v181 = vadd.f32 %v53, %v180
    %v182 = vpop.f32.mrf.mxu0
    %v183 = vadd.f32 %v57, %v182
    %184 = vmatprep.mubr.f32.mxu0 0.0
    %185 = vmatmul.mubr.f32.gmra.mxu0 %v82
    %v186 = vpop.f32.mrf.mxu0
    %v187 = vadd.f32 %v53, %v186
    %v188 = vpop.f32.mrf.mxu0
    %v189 = vadd.f32 %v57, %v188
    %190 = vmatprep.mubr.f32.mxu0 0.0
    %191 = vmatmul.mubr.f32.gmra.mxu0 %v85
    %v192 = vpop.f32.mrf.mxu0
    %v193 = vadd.f32 %v53, %v192
    %v194 = vpop.f32.mrf.mxu0
    %v195 = vadd.f32 %v57, %v194
    %196 = vmatprep.mubr.f32.mxu0 0.0
    %197 = vmatmul.mubr.f32.gmra.mxu0 %v88
    %v198 = vpop.f32.mrf.mxu0
    %v199 = vadd.f32 %v53, %v198
    %v200 = vpop.f32.mrf.mxu0
    %v201 = vadd.f32 %v57, %v200
    %202 = vmatprep.mubr.f32.mxu0 0.0
    %203 = vmatmul.mubr.f32.gmra.mxu0 %v91
    %v204 = vpop.f32.mrf.mxu0
    %v205 = vadd.f32 %v53, %v204
    %v206 = vpop.f32.mrf.mxu0
    %v207 = vadd.f32 %v57, %v206
    %208 = vmatprep.mubr.f32.mxu0 0.0
    %209 = vmatmul.mubr.f32.gmra.mxu0 %v94
    %v210 = vpop.f32.mrf.mxu0
    %v211 = vadd.f32 %v53, %v210
    %v212 = vpop.f32.mrf.mxu0
    %v213 = vadd.f32 %v57, %v212
    %214 = vmatprep.mubr.f32.mxu0 0.0
    %215 = vmatmul.mubr.f32.gmra.mxu0 %v97
    %v216 = vpop.f32.mrf.mxu0
    %v217 = vadd.f32 %v53, %v216
    %v218 = vpop.f32.mrf.mxu0
    %v219 = vadd.f32 %v57, %v218
    %220 = vdwg.mxu0
    %221 = vmatprep.subr.mxu0 0.0
    %222 = vmatpush1.msra.mxu0 0.0
    %223 = vmatprep.subr.mxu0 0.0
    %224 = vmatpush1.msra.mxu0 0.0
    %225 = vmatprep.subr.mxu0 0.0
    %226 = vmatpush1.msra.mxu0 0.0
    %227 = vmatprep.subr.mxu0 0.0
    %228 = vmatpush1.msra.mxu0 0.0
    %229 = vmatprep.subr.mxu0 0.0
    %230 = vmatpush1.msra.mxu0 0.0
    %231 = vmatprep.subr.mxu0 0.0
    %232 = vmatpush1.msra.mxu0 0.0
    %233 = vmatprep.subr.mxu0 0.0
    %234 = vmatpush1.msra.mxu0 0.0
    %235 = vmatprep.subr.mxu0 0.0
    %236 = vmatpush1.msra.mxu0 0.0
    %237 = vmatprep.subr.mxu0 0.0
    %238 = vmatpush1.msra.mxu0 0.0
    %239 = vmatprep.subr.mxu0 0.0
    %240 = vmatpush1.msra.mxu0 0.0
    %241 = vmatprep.subr.mxu0 0.0
    %242 = vmatpush1.msra.mxu0 0.0
    %243 = vmatprep.subr.mxu0 0.0
    %244 = vmatpush1.msra.mxu0 0.0
    %245 = vmatprep.subr.mxu0 0.0
    %246 = vmatpush1.msra.mxu0 0.0
    %247 = vmatprep.subr.mxu0 0.0
    %248 = vmatpush1.msra.mxu0 0.0
    %249 = vmatprep.subr.mxu0 0.0
    %250 = vmatpush1.msra.mxu0 0.0
    %251 = vmatprep.subr.mxu0 %v106
    %252 = vmatpush1.msra.mxu0 %v104
    %253 = vmatprep.subr.mxu0 0.0
    %254 = vmatpush2.msra.mxu0 0.0
    %255 = vmatprep.subr.mxu0 0.0
    %256 = vmatpush2.msra.mxu0 0.0
    %257 = vmatprep.subr.mxu0 0.0
    %258 = vmatpush2.msra.mxu0 0.0
    %259 = vmatprep.subr.mxu0 0.0
    %260 = vmatpush2.msra.mxu0 0.0
    %261 = vmatprep.subr.mxu0 0.0
    %262 = vmatpush2.msra.mxu0 0.0
    %263 = vmatprep.subr.mxu0 0.0
    %264 = vmatpush2.msra.mxu0 0.0
    %265 = vmatprep.subr.mxu0 0.0
    %266 = vmatpush2.msra.mxu0 0.0
    %267 = vmatprep.subr.mxu0 0.0
    %268 = vmatpush2.msra.mxu0 0.0
    %269 = vmatprep.subr.mxu0 0.0
    %270 = vmatpush2.msra.mxu0 0.0
    %271 = vmatprep.subr.mxu0 0.0
    %272 = vmatpush2.msra.mxu0 0.0
    %273 = vmatprep.subr.mxu0 0.0
    %274 = vmatpush2.msra.mxu0 0.0
    %275 = vmatprep.subr.mxu0 0.0
    %276 = vmatpush2.msra.mxu0 0.0
    %277 = vmatprep.subr.mxu0 0.0
    %278 = vmatpush2.msra.mxu0 0.0
    %279 = vmatprep.subr.mxu0 0.0
    %280 = vmatpush2.msra.mxu0 0.0
    %281 = vmatprep.subr.mxu0 0.0
    %282 = vmatpush2.msra.mxu0 0.0
    %283 = vmatprep.subr.mxu0 0.0
    %284 = vmatpush2.msra.mxu0 0.0
    %285 = vmatprep.mubr.f32.mxu0 0.0
    %286 = vmatmul.mubr.f32.gmra.mxu0 %v76
    %v287 = vpop.f32.mrf.mxu0
    %v288 = vadd.f32 %v61, %v287
    %v289 = vpop.f32.mrf.mxu0
    %v290 = vadd.f32 %v65, %v289
    %291 = vmatprep.mubr.f32.mxu0 0.0
    %292 = vmatmul.mubr.f32.gmra.mxu0 %v79
    %v293 = vpop.f32.mrf.mxu0
    %v294 = vadd.f32 %v61, %v293
    %v295 = vpop.f32.mrf.mxu0
    %v296 = vadd.f32 %v65, %v295
    %297 = vmatprep.mubr.f32.mxu0 0.0
    %298 = vmatmul.mubr.f32.gmra.mxu0 %v82
    %v299 = vpop.f32.mrf.mxu0
    %v300 = vadd.f32 %v61, %v299
    %v301 = vpop.f32.mrf.mxu0
    %v302 = vadd.f32 %v65, %v301
    %303 = vmatprep.mubr.f32.mxu0 0.0
    %304 = vmatmul.mubr.f32.gmra.mxu0 %v85
    %v305 = vpop.f32.mrf.mxu0
    %v306 = vadd.f32 %v61, %v305
    %v307 = vpop.f32.mrf.mxu0
    %v308 = vadd.f32 %v65, %v307
    %309 = vmatprep.mubr.f32.mxu0 0.0
    %310 = vmatmul.mubr.f32.gmra.mxu0 %v88
    %v311 = vpop.f32.mrf.mxu0
    %v312 = vadd.f32 %v61, %v311
    %v313 = vpop.f32.mrf.mxu0
    %v314 = vadd.f32 %v65, %v313
    %315 = vmatprep.mubr.f32.mxu0 0.0
    %316 = vmatmul.mubr.f32.gmra.mxu0 %v91
    %v317 = vpop.f32.mrf.mxu0
    %v318 = vadd.f32 %v61, %v317
    %v319 = vpop.f32.mrf.mxu0
    %v320 = vadd.f32 %v65, %v319
    %321 = vmatprep.mubr.f32.mxu0 0.0
    %322 = vmatmul.mubr.f32.gmra.mxu0 %v94
    %v323 = vpop.f32.mrf.mxu0
    %v324 = vadd.f32 %v61, %v323
    %v325 = vpop.f32.mrf.mxu0
    %v326 = vadd.f32 %v65, %v325
    %327 = vmatprep.mubr.f32.mxu0 0.0
    %328 = vmatmul.mubr.f32.gmra.mxu0 %v97
    %v329 = vpop.f32.mrf.mxu0
    %v330 = vadd.f32 %v61, %v329
    %v331 = vpop.f32.mrf.mxu0
    %v332 = vadd.f32 %v65, %v331
    %333 = vdwg.mxu0
    %334 = vst [vmem:[#allocation2] sm:$0xff] %v175
    %335 = vst [vmem:[#allocation2 + $0x8] sm:$0xff] %v177
    %336 = vst [vmem:[#allocation2 + $0x10] sm:$0xff] %v288
    %337 = vst [vmem:[#allocation2 + $0x18] sm:$0xff] %v290
    %338 = vst [vmem:[#allocation2 + $0x20] sm:$0xff] %v181
    %339 = vst [vmem:[#allocation2 + $0x28] sm:$0xff] %v183
    %340 = vst [vmem:[#allocation2 + $0x30] sm:$0xff] %v294
    %341 = vst [vmem:[#allocation2 + $0x38] sm:$0xff] %v296
    %342 = vst [vmem:[#allocation2 + $0x40] sm:$0xff] %v187
    %343 = vst [vmem:[#allocation2 + $0x48] sm:$0xff] %v189
    %344 = vst [vmem:[#allocation2 + $0x50] sm:$0xff] %v300
    %345 = vst [vmem:[#allocation2 + $0x58] sm:$0xff] %v302
    %346 = vst [vmem:[#allocation2 + $0x60] sm:$0xff] %v193
    %347 = vst [vmem:[#allocation2 + $0x68] sm:$0xff] %v195
    %348 = vst [vmem:[#allocation2 + $0x70] sm:$0xff] %v306
    %349 = vst [vmem:[#allocation2 + $0x78] sm:$0xff] %v308
    %350 = vst [vmem:[#allocation2 + $0x80] sm:$0xff] %v199
    %351 = vst [vmem:[#allocation2 + $0x88] sm:$0xff] %v201
    %352 = vst [vmem:[#allocation2 + $0x90] sm:$0xff] %v312
    %353 = vst [vmem:[#allocation2 + $0x98] sm:$0xff] %v314
    %354 = vst [vmem:[#allocation2 + $0xa0] sm:$0xff] %v205
    %355 = vst [vmem:[#allocation2 + $0xa8] sm:$0xff] %v207
    %356 = vst [vmem:[#allocation2 + $0xb0] sm:$0xff] %v318
    %357 = vst [vmem:[#allocation2 + $0xb8] sm:$0xff] %v320
    %358 = vst [vmem:[#allocation2 + $0xc0] sm:$0xff] %v211
    %359 = vst [vmem:[#allocation2 + $0xc8] sm:$0xff] %v213
    %360 = vst [vmem:[#allocation2 + $0xd0] sm:$0xff] %v324
    %361 = vst [vmem:[#allocation2 + $0xd8] sm:$0xff] %v326
    %362 = vst [vmem:[#allocation2 + $0xe0] sm:$0xff] %v217
    %363 = vst [vmem:[#allocation2 + $0xe8] sm:$0xff] %v219
    %364 = vst [vmem:[#allocation2 + $0xf0] sm:$0xff] %v330
    %365 = vst [vmem:[#allocation2 + $0xf8] sm:$0xff] %v332
    %v366 = vld [vmem:[#allocation3] sm:$0xff]
    %v367 = vld [vmem:[#allocation4] sm:$0xff]
    %s368 = smul.u32 0, 4
    %s369 = smul.addr %s368, 8
    %s370 = scalar_lea.vmem [#allocation2], %s369
    %v371 = vld [vmem:[%s370] sm:$0xff]
    %v372 = vld [vmem:[%s370 + $0x8] sm:$0xff]
    %v373 = vld [vmem:[%s370 + $0x10] sm:$0xff]
    %v374 = vld [vmem:[%s370 + $0x18] sm:$0xff]
    %v375 = vld [vmem:[#allocation5] sm:$0xff]
    %v376 = vld [vmem:[#allocation5 + $0x8] sm:$0xff]
    %v377 = vld [vmem:[#allocation5 + $0x10] sm:$0xff]
    %v378 = vld [vmem:[#allocation5 + $0x18] sm:$0xff]
    %v379 = vld [vmem:[#allocation5 + $0x20] sm:$0xff]
    %v380 = vld [vmem:[#allocation5 + $0x28] sm:$0xff]
    %v381 = vld [vmem:[#allocation5 + $0x30] sm:$0xff]
    %v382 = vld [vmem:[#allocation5 + $0x38] sm:$0xff]
    %v383 = vld [vmem:[#allocation5 + $0x40] sm:$0xff]
    %v384 = vld [vmem:[#allocation5 + $0x48] sm:$0xff]
    %v385 = vld [vmem:[#allocation5 + $0x50] sm:$0xff]
    %v386 = vld [vmem:[#allocation5 + $0x58] sm:$0xff]
    %v387 = vld [vmem:[#allocation5 + $0x60] sm:$0xff]
    %v388 = vld [vmem:[#allocation5 + $0x68] sm:$0xff]
    %v389 = vld [vmem:[#allocation5 + $0x70] sm:$0xff]
    %v390 = vld [vmem:[#allocation5 + $0x78] sm:$0xff]
    %v391 = vld [vmem:[#allocation5 + $0x80] sm:$0xff]
    %v392 = vld [vmem:[#allocation5 + $0x88] sm:$0xff]
    %v393 = vld [vmem:[#allocation5 + $0x90] sm:$0xff]
    %v394 = vld [vmem:[#allocation5 + $0x98] sm:$0xff]
    %v395 = vld [vmem:[#allocation5 + $0xa0] sm:$0xff]
    %v396 = vld [vmem:[#allocation5 + $0xa8] sm:$0xff]
    %v397 = vld [vmem:[#allocation5 + $0xb0] sm:$0xff]
    %v398 = vld [vmem:[#allocation5 + $0xb8] sm:$0xff]
    %v399 = vld [vmem:[#allocation5 + $0xc0] sm:$0xff]
    %v400 = vld [vmem:[#allocation5 + $0xc8] sm:$0xff]
    %v401 = vld [vmem:[#allocation5 + $0xd0] sm:$0xff]
    %v402 = vld [vmem:[#allocation5 + $0xd8] sm:$0xff]
    %v403 = vld [vmem:[#allocation5 + $0xe0] sm:$0xff]
    %v404 = vld [vmem:[#allocation5 + $0xe8] sm:$0xff]
    %v405 = vld [vmem:[#allocation5 + $0xf0] sm:$0xff]
    %v406 = vld [vmem:[#allocation5 + $0xf8] sm:$0xff]
    %v407 = vld [vmem:[#allocation5 + $0x100] sm:$0xff]
    %v408 = vld [vmem:[#allocation5 + $0x108] sm:$0xff]
    %v409 = vld [vmem:[#allocation5 + $0x110] sm:$0xff]
    %v410 = vld [vmem:[#allocation5 + $0x118] sm:$0xff]
    %v411 = vld [vmem:[#allocation5 + $0x120] sm:$0xff]
    %v412 = vld [vmem:[#allocation5 + $0x128] sm:$0xff]
    %v413 = vld [vmem:[#allocation5 + $0x130] sm:$0xff]
    %v414 = vld [vmem:[#allocation5 + $0x138] sm:$0xff]
    %v415 = vld [vmem:[#allocation5 + $0x140] sm:$0xff]
    %v416 = vld [vmem:[#allocation5 + $0x148] sm:$0xff]
    %v417 = vld [vmem:[#allocation5 + $0x150] sm:$0xff]
    %v418 = vld [vmem:[#allocation5 + $0x158] sm:$0xff]
    %v419 = vld [vmem:[#allocation5 + $0x160] sm:$0xff]
    %v420 = vld [vmem:[#allocation5 + $0x168] sm:$0xff]
    %v421 = vld [vmem:[#allocation5 + $0x170] sm:$0xff]
    %v422 = vld [vmem:[#allocation5 + $0x178] sm:$0xff]
    %v423 = vld [vmem:[#allocation5 + $0x180] sm:$0xff]
    %v424 = vld [vmem:[#allocation5 + $0x188] sm:$0xff]
    %v425 = vld [vmem:[#allocation5 + $0x190] sm:$0xff]
    %v426 = vld [vmem:[#allocation5 + $0x198] sm:$0xff]
    %v427 = vld [vmem:[#allocation5 + $0x1a0] sm:$0xff]
    %v428 = vld [vmem:[#allocation5 + $0x1a8] sm:$0xff]
    %v429 = vld [vmem:[#allocation5 + $0x1b0] sm:$0xff]
    %v430 = vld [vmem:[#allocation5 + $0x1b8] sm:$0xff]
    %v431 = vld [vmem:[#allocation5 + $0x1c0] sm:$0xff]
    %v432 = vld [vmem:[#allocation5 + $0x1c8] sm:$0xff]
    %v433 = vld [vmem:[#allocation5 + $0x1d0] sm:$0xff]
    %v434 = vld [vmem:[#allocation5 + $0x1d8] sm:$0xff]
    %v435 = vld [vmem:[#allocation5 + $0x1e0] sm:$0xff]
    %v436 = vld [vmem:[#allocation5 + $0x1e8] sm:$0xff]
    %v437 = vld [vmem:[#allocation5 + $0x1f0] sm:$0xff]
    %v438 = vld [vmem:[#allocation5 + $0x1f8] sm:$0xff]
    %439 = vmatprep.subr.mxu0 %v436
    %440 = vmatpush1.msra.mxu0 %v435
    %441 = vmatprep.subr.mxu0 %v432
    %442 = vmatpush1.msra.mxu0 %v431
    %443 = vmatprep.subr.mxu0 %v428
    %444 = vmatpush1.msra.mxu0 %v427
    %445 = vmatprep.subr.mxu0 %v424
    %446 = vmatpush1.msra.mxu0 %v423
    %447 = vmatprep.subr.mxu0 %v420
    %448 = vmatpush1.msra.mxu0 %v419
    %449 = vmatprep.subr.mxu0 %v416
    %450 = vmatpush1.msra.mxu0 %v415
    %451 = vmatprep.subr.mxu0 %v412
    %452 = vmatpush1.msra.mxu0 %v411
    %453 = vmatprep.subr.mxu0 %v408
    %454 = vmatpush1.msra.mxu0 %v407
    %455 = vmatprep.subr.mxu0 %v404
    %456 = vmatpush1.msra.mxu0 %v403
    %457 = vmatprep.subr.mxu0 %v400
    %458 = vmatpush1.msra.mxu0 %v399
    %459 = vmatprep.subr.mxu0 %v396
    %460 = vmatpush1.msra.mxu0 %v395
    %461 = vmatprep.subr.mxu0 %v392
    %462 = vmatpush1.msra.mxu0 %v391
    %463 = vmatprep.subr.mxu0 %v388
    %464 = vmatpush1.msra.mxu0 %v387
    %465 = vmatprep.subr.mxu0 %v384
    %466 = vmatpush1.msra.mxu0 %v383
    %467 = vmatprep.subr.mxu0 %v380
    %468 = vmatpush1.msra.mxu0 %v379
    %469 = vmatprep.subr.mxu0 %v376
    %470 = vmatpush1.msra.mxu0 %v375
    %471 = vmatprep.subr.mxu0 0.0
    %472 = vmatpush2.msra.mxu0 0.0
    %473 = vmatprep.subr.mxu0 0.0
    %474 = vmatpush2.msra.mxu0 0.0
    %475 = vmatprep.subr.mxu0 0.0
    %476 = vmatpush2.msra.mxu0 0.0
    %477 = vmatprep.subr.mxu0 0.0
    %478 = vmatpush2.msra.mxu0 0.0
    %479 = vmatprep.subr.mxu0 0.0
    %480 = vmatpush2.msra.mxu0 0.0
    %481 = vmatprep.subr.mxu0 0.0
    %482 = vmatpush2.msra.mxu0 0.0
    %483 = vmatprep.subr.mxu0 0.0
    %484 = vmatpush2.msra.mxu0 0.0
    %485 = vmatprep.subr.mxu0 0.0
    %486 = vmatpush2.msra.mxu0 0.0
    %487 = vmatprep.subr.mxu0 0.0
    %488 = vmatpush2.msra.mxu0 0.0
    %489 = vmatprep.subr.mxu0 0.0
    %490 = vmatpush2.msra.mxu0 0.0
    %491 = vmatprep.subr.mxu0 0.0
    %492 = vmatpush2.msra.mxu0 0.0
    %493 = vmatprep.subr.mxu0 0.0
    %494 = vmatpush2.msra.mxu0 0.0
    %495 = vmatprep.subr.mxu0 0.0
    %496 = vmatpush2.msra.mxu0 0.0
    %497 = vmatprep.subr.mxu0 0.0
    %498 = vmatpush2.msra.mxu0 0.0
    %499 = vmatprep.subr.mxu0 0.0
    %500 = vmatpush2.msra.mxu0 0.0
    %501 = vmatprep.subr.mxu0 0.0
    %502 = vmatpush2.msra.mxu0 0.0
    %503 = vmatprep.mubr.f32.mxu0 0.0
    %504 = vmatmul.mubr.f32.gmra.mxu0 %v366
    %v505 = vpop.f32.mrf.mxu0
    %v506 = vadd.f32 0.0, %v505
    %v507 = vpop.f32.mrf.mxu0
    %v508 = vadd.f32 0.0, %v507
    %509 = vdwg.mxu0
    %510 = vmatprep.subr.mxu0 %v438
    %511 = vmatpush1.msra.mxu0 %v437
    %512 = vmatprep.subr.mxu0 %v434
    %513 = vmatpush1.msra.mxu0 %v433
    %514 = vmatprep.subr.mxu0 %v430
    %515 = vmatpush1.msra.mxu0 %v429
    %516 = vmatprep.subr.mxu0 %v426
    %517 = vmatpush1.msra.mxu0 %v425
    %518 = vmatprep.subr.mxu0 %v422
    %519 = vmatpush1.msra.mxu0 %v421
    %520 = vmatprep.subr.mxu0 %v418
    %521 = vmatpush1.msra.mxu0 %v417
    %522 = vmatprep.subr.mxu0 %v414
    %523 = vmatpush1.msra.mxu0 %v413
    %524 = vmatprep.subr.mxu0 %v410
    %525 = vmatpush1.msra.mxu0 %v409
    %526 = vmatprep.subr.mxu0 %v406
    %527 = vmatpush1.msra.mxu0 %v405
    %528 = vmatprep.subr.mxu0 %v402
    %529 = vmatpush1.msra.mxu0 %v401
    %530 = vmatprep.subr.mxu0 %v398
    %531 = vmatpush1.msra.mxu0 %v397
    %532 = vmatprep.subr.mxu0 %v394
    %533 = vmatpush1.msra.mxu0 %v393
    %534 = vmatprep.subr.mxu0 %v390
    %535 = vmatpush1.msra.mxu0 %v389
    %536 = vmatprep.subr.mxu0 %v386
    %537 = vmatpush1.msra.mxu0 %v385
    %538 = vmatprep.subr.mxu0 %v382
    %539 = vmatpush1.msra.mxu0 %v381
    %540 = vmatprep.subr.mxu0 %v378
    %541 = vmatpush1.msra.mxu0 %v377
    %542 = vmatprep.subr.mxu0 0.0
    %543 = vmatpush2.msra.mxu0 0.0
    %544 = vmatprep.subr.mxu0 0.0
    %545 = vmatpush2.msra.mxu0 0.0
    %546 = vmatprep.subr.mxu0 0.0
    %547 = vmatpush2.msra.mxu0 0.0
    %548 = vmatprep.subr.mxu0 0.0
    %549 = vmatpush2.msra.mxu0 0.0
    %550 = vmatprep.subr.mxu0 0.0
    %551 = vmatpush2.msra.mxu0 0.0
    %552 = vmatprep.subr.mxu0 0.0
    %553 = vmatpush2.msra.mxu0 0.0
    %554 = vmatprep.subr.mxu0 0.0
    %555 = vmatpush2.msra.mxu0 0.0
    %556 = vmatprep.subr.mxu0 0.0
    %557 = vmatpush2.msra.mxu0 0.0
    %558 = vmatprep.subr.mxu0 0.0
    %559 = vmatpush2.msra.mxu0 0.0
    %560 = vmatprep.subr.mxu0 0.0
    %561 = vmatpush2.msra.mxu0 0.0
    %562 = vmatprep.subr.mxu0 0.0
    %563 = vmatpush2.msra.mxu0 0.0
    %564 = vmatprep.subr.mxu0 0.0
    %565 = vmatpush2.msra.mxu0 0.0
    %566 = vmatprep.subr.mxu0 0.0
    %567 = vmatpush2.msra.mxu0 0.0
    %568 = vmatprep.subr.mxu0 0.0
    %569 = vmatpush2.msra.mxu0 0.0
    %570 = vmatprep.subr.mxu0 0.0
    %571 = vmatpush2.msra.mxu0 0.0
    %572 = vmatprep.subr.mxu0 0.0
    %573 = vmatpush2.msra.mxu0 0.0
    %574 = vmatprep.mubr.f32.mxu0 0.0
    %575 = vmatmul.mubr.f32.gmra.mxu0 %v366
    %v576 = vpop.f32.mrf.mxu0
    %v577 = vadd.f32 0.0, %v576
    %v578 = vpop.f32.mrf.mxu0
    %v579 = vadd.f32 0.0, %v578
    %580 = vdwg.mxu0
    %v581 = vadd.f32 %v371, %v506
    %v582 = vadd.f32 %v372, %v508
    %v583 = vadd.f32 %v373, %v577
    %v584 = vadd.f32 %v374, %v579
    %v585 = vxor.u32 %v581, 2147483648
    %v586 = vmul.f32 %v585, 1.442695
    %v587 = vpow.pop %v586
    %v588 = vadd.f32 %v587, 1.0
    %v589 = vrcp.pop %v588
    %v590 = vmul.f32 1.0, %v589
    %v591 = vxor.u32 %v582, 2147483648
    %v592 = vmul.f32 %v591, 1.442695
    %v593 = vpow.pop %v592
    %v594 = vadd.f32 %v593, 1.0
    %v595 = vrcp.pop %v594
    %v596 = vmul.f32 1.0, %v595
    %v597 = vtanh.pop %v583
    %v598 = vxor.u32 %v584, 2147483648
    %v599 = vmul.f32 %v598, 1.442695
    %v600 = vpow.pop %v599
    %v601 = vadd.f32 %v600, 1.0
    %v602 = vrcp.pop %v601
    %v603 = vmul.f32 1.0, %v602
    %v604 = vmul.f32 %v596, %v367
    %v605 = vmul.f32 %v590, %v597
    %v606 = vadd.f32 %v604, %v605
    %v607 = vtanh.pop %v606
    %v608 = vmul.f32 %v603, %v607
    %s609 = smul.u32 1, 4
    %s610 = smul.addr %s609, 8
    %s611 = scalar_lea.vmem [#allocation2], %s610
    %v612 = vld [vmem:[%s611] sm:$0xff]
    %v613 = vld [vmem:[%s611 + $0x8] sm:$0xff]
    %v614 = vld [vmem:[%s611 + $0x10] sm:$0xff]
    %v615 = vld [vmem:[%s611 + $0x18] sm:$0xff]
    %616 = vmatprep.subr.mxu0 %v436
    %617 = vmatpush1.msra.mxu0 %v435
    %618 = vmatprep.subr.mxu0 %v432
    %619 = vmatpush1.msra.mxu0 %v431
    %620 = vmatprep.subr.mxu0 %v428
    %621 = vmatpush1.msra.mxu0 %v427
    %622 = vmatprep.subr.mxu0 %v424
    %623 = vmatpush1.msra.mxu0 %v423
    %624 = vmatprep.subr.mxu0 %v420
    %625 = vmatpush1.msra.mxu0 %v419
    %626 = vmatprep.subr.mxu0 %v416
    %627 = vmatpush1.msra.mxu0 %v415
    %628 = vmatprep.subr.mxu0 %v412
    %629 = vmatpush1.msra.mxu0 %v411
    %630 = vmatprep.subr.mxu0 %v408
    %631 = vmatpush1.msra.mxu0 %v407
    %632 = vmatprep.subr.mxu0 %v404
    %633 = vmatpush1.msra.mxu0 %v403
    %634 = vmatprep.subr.mxu0 %v400
    %635 = vmatpush1.msra.mxu0 %v399
    %636 = vmatprep.subr.mxu0 %v396
    %637 = vmatpush1.msra.mxu0 %v395
    %638 = vmatprep.subr.mxu0 %v392
    %639 = vmatpush1.msra.mxu0 %v391
    %640 = vmatprep.subr.mxu0 %v388
    %641 = vmatpush1.msra.mxu0 %v387
    %642 = vmatprep.subr.mxu0 %v384
    %643 = vmatpush1.msra.mxu0 %v383
    %644 = vmatprep.subr.mxu0 %v380
    %645 = vmatpush1.msra.mxu0 %v379
    %646 = vmatprep.subr.mxu0 %v376
    %647 = vmatpush1.msra.mxu0 %v375
    %648 = vmatprep.subr.mxu0 0.0
    %649 = vmatpush2.msra.mxu0 0.0
    %650 = vmatprep.subr.mxu0 0.0
    %651 = vmatpush2.msra.mxu0 0.0
    %652 = vmatprep.subr.mxu0 0.0
    %653 = vmatpush2.msra.mxu0 0.0
    %654 = vmatprep.subr.mxu0 0.0
    %655 = vmatpush2.msra.mxu0 0.0
    %656 = vmatprep.subr.mxu0 0.0
    %657 = vmatpush2.msra.mxu0 0.0
    %658 = vmatprep.subr.mxu0 0.0
    %659 = vmatpush2.msra.mxu0 0.0
    %660 = vmatprep.subr.mxu0 0.0
    %661 = vmatpush2.msra.mxu0 0.0
    %662 = vmatprep.subr.mxu0 0.0
    %663 = vmatpush2.msra.mxu0 0.0
    %664 = vmatprep.subr.mxu0 0.0
    %665 = vmatpush2.msra.mxu0 0.0
    %666 = vmatprep.subr.mxu0 0.0
    %667 = vmatpush2.msra.mxu0 0.0
    %668 = vmatprep.subr.mxu0 0.0
    %669 = vmatpush2.msra.mxu0 0.0
    %670 = vmatprep.subr.mxu0 0.0
    %671 = vmatpush2.msra.mxu0 0.0
    %672 = vmatprep.subr.mxu0 0.0
    %673 = vmatpush2.msra.mxu0 0.0
    %674 = vmatprep.subr.mxu0 0.0
    %675 = vmatpush2.msra.mxu0 0.0
    %676 = vmatprep.subr.mxu0 0.0
    %677 = vmatpush2.msra.mxu0 0.0
    %678 = vmatprep.subr.mxu0 0.0
    %679 = vmatpush2.msra.mxu0 0.0
    %680 = vmatprep.mubr.f32.mxu0 0.0
    %681 = vmatmul.mubr.f32.gmra.mxu0 %v608
    %v682 = vpop.f32.mrf.mxu0
    %v683 = vadd.f32 0.0, %v682
    %v684 = vpop.f32.mrf.mxu0
    %v685 = vadd.f32 0.0, %v684
    %686 = vdwg.mxu0
    %687 = vmatprep.subr.mxu0 %v438
    %688 = vmatpush1.msra.mxu0 %v437
    %689 = vmatprep.subr.mxu0 %v434
    %690 = vmatpush1.msra.mxu0 %v433
    %691 = vmatprep.subr.mxu0 %v430
    %692 = vmatpush1.msra.mxu0 %v429
    %693 = vmatprep.subr.mxu0 %v426
    %694 = vmatpush1.msra.mxu0 %v425
    %695 = vmatprep.subr.mxu0 %v422
    %696 = vmatpush1.msra.mxu0 %v421
    %697 = vmatprep.subr.mxu0 %v418
    %698 = vmatpush1.msra.mxu0 %v417
    %699 = vmatprep.subr.mxu0 %v414
    %700 = vmatpush1.msra.mxu0 %v413
    %701 = vmatprep.subr.mxu0 %v410
    %702 = vmatpush1.msra.mxu0 %v409
    %703 = vmatprep.subr.mxu0 %v406
    %704 = vmatpush1.msra.mxu0 %v405
    %705 = vmatprep.subr.mxu0 %v402
    %706 = vmatpush1.msra.mxu0 %v401
    %707 = vmatprep.subr.mxu0 %v398
    %708 = vmatpush1.msra.mxu0 %v397
    %709 = vmatprep.subr.mxu0 %v394
    %710 = vmatpush1.msra.mxu0 %v393
    %711 = vmatprep.subr.mxu0 %v390
    %712 = vmatpush1.msra.mxu0 %v389
    %713 = vmatprep.subr.mxu0 %v386
    %714 = vmatpush1.msra.mxu0 %v385
    %715 = vmatprep.subr.mxu0 %v382
    %716 = vmatpush1.msra.mxu0 %v381
    %717 = vmatprep.subr.mxu0 %v378
    %718 = vmatpush1.msra.mxu0 %v377
    %719 = vmatprep.subr.mxu0 0.0
    %720 = vmatpush2.msra.mxu0 0.0
    %721 = vmatprep.subr.mxu0 0.0
    %722 = vmatpush2.msra.mxu0 0.0
    %723 = vmatprep.subr.mxu0 0.0
    %724 = vmatpush2.msra.mxu0 0.0
    %725 = vmatprep.subr.mxu0 0.0
    %726 = vmatpush2.msra.mxu0 0.0
    %727 = vmatprep.subr.mxu0 0.0
    %728 = vmatpush2.msra.mxu0 0.0
    %729 = vmatprep.subr.mxu0 0.0
    %730 = vmatpush2.msra.mxu0 0.0
    %731 = vmatprep.subr.mxu0 0.0
    %732 = vmatpush2.msra.mxu0 0.0
    %733 = vmatprep.subr.mxu0 0.0
    %734 = vmatpush2.msra.mxu0 0.0
    %735 = vmatprep.subr.mxu0 0.0
    %736 = vmatpush2.msra.mxu0 0.0
    %737 = vmatprep.subr.mxu0 0.0
    %738 = vmatpush2.msra.mxu0 0.0
    %739 = vmatprep.subr.mxu0 0.0
    %740 = vmatpush2.msra.mxu0 0.0
    %741 = vmatprep.subr.mxu0 0.0
    %742 = vmatpush2.msra.mxu0 0.0
    %743 = vmatprep.subr.mxu0 0.0
    %744 = vmatpush2.msra.mxu0 0.0
    %745 = vmatprep.subr.mxu0 0.0
    %746 = vmatpush2.msra.mxu0 0.0
    %747 = vmatprep.subr.mxu0 0.0
    %748 = vmatpush2.msra.mxu0 0.0
    %749 = vmatprep.subr.mxu0 0.0
    %750 = vmatpush2.msra.mxu0 0.0
    %751 = vmatprep.mubr.f32.mxu0 0.0
    %752 = vmatmul.mubr.f32.gmra.mxu0 %v608
    %v753 = vpop.f32.mrf.mxu0
    %v754 = vadd.f32 0.0, %v753
    %v755 = vpop.f32.mrf.mxu0
    %v756 = vadd.f32 0.0, %v755
    %757 = vdwg.mxu0
    %v758 = vadd.f32 %v612, %v683
    %v759 = vadd.f32 %v613, %v685
    %v760 = vadd.f32 %v614, %v754
    %v761 = vadd.f32 %v615, %v756
    %v762 = vxor.u32 %v758, 2147483648
    %v763 = vmul.f32 %v762, 1.442695
    %v764 = vpow.pop %v763
    %v765 = vadd.f32 %v764, 1.0
    %v766 = vrcp.pop %v765
    %v767 = vmul.f32 1.0, %v766
    %v768 = vxor.u32 %v759, 2147483648
    %v769 = vmul.f32 %v768, 1.442695
    %v770 = vpow.pop %v769
    %v771 = vadd.f32 %v770, 1.0
    %v772 = vrcp.pop %v771
    %v773 = vmul.f32 1.0, %v772
    %v774 = vtanh.pop %v760
    %v775 = vxor.u32 %v761, 2147483648
    %v776 = vmul.f32 %v775, 1.442695
    %v777 = vpow.pop %v776
    %v778 = vadd.f32 %v777, 1.0
    %v779 = vrcp.pop %v778
    %v780 = vmul.f32 1.0, %v779
    %v781 = vmul.f32 %v773, %v606
    %v782 = vmul.f32 %v767, %v774
    %v783 = vadd.f32 %v781, %v782
    %v784 = vtanh.pop %v783
    %v785 = vmul.f32 %v780, %v784
    %s786 = smul.u32 2, 4
    %s787 = smul.addr %s786, 8
    %s788 = scalar_lea.vmem [#allocation2], %s787
    %v789 = vld [vmem:[%s788] sm:$0xff]
    %v790 = vld [vmem:[%s788 + $0x8] sm:$0xff]
    %v791 = vld [vmem:[%s788 + $0x10] sm:$0xff]
    %v792 = vld [vmem:[%s788 + $0x18] sm:$0xff]
    %793 = vmatprep.subr.mxu0 %v436
    %794 = vmatpush1.msra.mxu0 %v435
    %795 = vmatprep.subr.mxu0 %v432
    %796 = vmatpush1.msra.mxu0 %v431
    %797 = vmatprep.subr.mxu0 %v428
    %798 = vmatpush1.msra.mxu0 %v427
    %799 = vmatprep.subr.mxu0 %v424
    %800 = vmatpush1.msra.mxu0 %v423
    %801 = vmatprep.subr.mxu0 %v420
    %802 = vmatpush1.msra.mxu0 %v419
    %803 = vmatprep.subr.mxu0 %v416
    %804 = vmatpush1.msra.mxu0 %v415
    %805 = vmatprep.subr.mxu0 %v412
    %806 = vmatpush1.msra.mxu0 %v411
    %807 = vmatprep.subr.mxu0 %v408
    %808 = vmatpush1.msra.mxu0 %v407
    %809 = vmatprep.subr.mxu0 %v404
    %810 = vmatpush1.msra.mxu0 %v403
    %811 = vmatprep.subr.mxu0 %v400
    %812 = vmatpush1.msra.mxu0 %v399
    %813 = vmatprep.subr.mxu0 %v396
    %814 = vmatpush1.msra.mxu0 %v395
    %815 = vmatprep.subr.mxu0 %v392
    %816 = vmatpush1.msra.mxu0 %v391
    %817 = vmatprep.subr.mxu0 %v388
    %818 = vmatpush1.msra.mxu0 %v387
    %819 = vmatprep.subr.mxu0 %v384
    %820 = vmatpush1.msra.mxu0 %v383
    %821 = vmatprep.subr.mxu0 %v380
    %822 = vmatpush1.msra.mxu0 %v379
    %823 = vmatprep.subr.mxu0 %v376
    %824 = vmatpush1.msra.mxu0 %v375
    %825 = vmatprep.subr.mxu0 0.0
    %826 = vmatpush2.msra.mxu0 0.0
    %827 = vmatprep.subr.mxu0 0.0
    %828 = vmatpush2.msra.mxu0 0.0
    %829 = vmatprep.subr.mxu0 0.0
    %830 = vmatpush2.msra.mxu0 0.0
    %831 = vmatprep.subr.mxu0 0.0
    %832 = vmatpush2.msra.mxu0 0.0
    %833 = vmatprep.subr.mxu0 0.0
    %834 = vmatpush2.msra.mxu0 0.0
    %835 = vmatprep.subr.mxu0 0.0
    %836 = vmatpush2.msra.mxu0 0.0
    %837 = vmatprep.subr.mxu0 0.0
    %838 = vmatpush2.msra.mxu0 0.0
    %839 = vmatprep.subr.mxu0 0.0
    %840 = vmatpush2.msra.mxu0 0.0
    %841 = vmatprep.subr.mxu0 0.0
    %842 = vmatpush2.msra.mxu0 0.0
    %843 = vmatprep.subr.mxu0 0.0
    %844 = vmatpush2.msra.mxu0 0.0
    %845 = vmatprep.subr.mxu0 0.0
    %846 = vmatpush2.msra.mxu0 0.0
    %847 = vmatprep.subr.mxu0 0.0
    %848 = vmatpush2.msra.mxu0 0.0
    %849 = vmatprep.subr.mxu0 0.0
    %850 = vmatpush2.msra.mxu0 0.0
    %851 = vmatprep.subr.mxu0 0.0
    %852 = vmatpush2.msra.mxu0 0.0
    %853 = vmatprep.subr.mxu0 0.0
    %854 = vmatpush2.msra.mxu0 0.0
    %855 = vmatprep.subr.mxu0 0.0
    %856 = vmatpush2.msra.mxu0 0.0
    %857 = vmatprep.mubr.f32.mxu0 0.0
    %858 = vmatmul.mubr.f32.gmra.mxu0 %v785
    %v859 = vpop.f32.mrf.mxu0
    %v860 = vadd.f32 0.0, %v859
    %v861 = vpop.f32.mrf.mxu0
    %v862 = vadd.f32 0.0, %v861
    %863 = vdwg.mxu0
    %864 = vmatprep.subr.mxu0 %v438
    %865 = vmatpush1.msra.mxu0 %v437
    %866 = vmatprep.subr.mxu0 %v434
    %867 = vmatpush1.msra.mxu0 %v433
    %868 = vmatprep.subr.mxu0 %v430
    %869 = vmatpush1.msra.mxu0 %v429
    %870 = vmatprep.subr.mxu0 %v426
    %871 = vmatpush1.msra.mxu0 %v425
    %872 = vmatprep.subr.mxu0 %v422
    %873 = vmatpush1.msra.mxu0 %v421
    %874 = vmatprep.subr.mxu0 %v418
    %875 = vmatpush1.msra.mxu0 %v417
    %876 = vmatprep.subr.mxu0 %v414
    %877 = vmatpush1.msra.mxu0 %v413
    %878 = vmatprep.subr.mxu0 %v410
    %879 = vmatpush1.msra.mxu0 %v409
    %880 = vmatprep.subr.mxu0 %v406
    %881 = vmatpush1.msra.mxu0 %v405
    %882 = vmatprep.subr.mxu0 %v402
    %883 = vmatpush1.msra.mxu0 %v401
    %884 = vmatprep.subr.mxu0 %v398
    %885 = vmatpush1.msra.mxu0 %v397
    %886 = vmatprep.subr.mxu0 %v394
    %887 = vmatpush1.msra.mxu0 %v393
    %888 = vmatprep.subr.mxu0 %v390
    %889 = vmatpush1.msra.mxu0 %v389
    %890 = vmatprep.subr.mxu0 %v386
    %891 = vmatpush1.msra.mxu0 %v385
    %892 = vmatprep.subr.mxu0 %v382
    %893 = vmatpush1.msra.mxu0 %v381
    %894 = vmatprep.subr.mxu0 %v378
    %895 = vmatpush1.msra.mxu0 %v377
    %896 = vmatprep.subr.mxu0 0.0
    %897 = vmatpush2.msra.mxu0 0.0
    %898 = vmatprep.subr.mxu0 0.0
    %899 = vmatpush2.msra.mxu0 0.0
    %900 = vmatprep.subr.mxu0 0.0
    %901 = vmatpush2.msra.mxu0 0.0
    %902 = vmatprep.subr.mxu0 0.0
    %903 = vmatpush2.msra.mxu0 0.0
    %904 = vmatprep.subr.mxu0 0.0
    %905 = vmatpush2.msra.mxu0 0.0
    %906 = vmatprep.subr.mxu0 0.0
    %907 = vmatpush2.msra.mxu0 0.0
    %908 = vmatprep.subr.mxu0 0.0
    %909 = vmatpush2.msra.mxu0 0.0
    %910 = vmatprep.subr.mxu0 0.0
    %911 = vmatpush2.msra.mxu0 0.0
    %912 = vmatprep.subr.mxu0 0.0
    %913 = vmatpush2.msra.mxu0 0.0
    %914 = vmatprep.subr.mxu0 0.0
    %915 = vmatpush2.msra.mxu0 0.0
    %916 = vmatprep.subr.mxu0 0.0
    %917 = vmatpush2.msra.mxu0 0.0
    %918 = vmatprep.subr.mxu0 0.0
    %919 = vmatpush2.msra.mxu0 0.0
    %920 = vmatprep.subr.mxu0 0.0
    %921 = vmatpush2.msra.mxu0 0.0
    %922 = vmatprep.subr.mxu0 0.0
    %923 = vmatpush2.msra.mxu0 0.0
    %924 = vmatprep.subr.mxu0 0.0
    %925 = vmatpush2.msra.mxu0 0.0
    %926 = vmatprep.subr.mxu0 0.0
    %927 = vmatpush2.msra.mxu0 0.0
    %928 = vmatprep.mubr.f32.mxu0 0.0
    %929 = vmatmul.mubr.f32.gmra.mxu0 %v785
    %v930 = vpop.f32.mrf.mxu0
    %v931 = vadd.f32 0.0, %v930
    %v932 = vpop.f32.mrf.mxu0
    %v933 = vadd.f32 0.0, %v932
    %934 = vdwg.mxu0
    %v935 = vadd.f32 %v789, %v860
    %v936 = vadd.f32 %v790, %v862
    %v937 = vadd.f32 %v791, %v931
    %v938 = vadd.f32 %v792, %v933
    %v939 = vxor.u32 %v935, 2147483648
    %v940 = vmul.f32 %v939, 1.442695
    %v941 = vpow.pop %v940
    %v942 = vadd.f32 %v941, 1.0
    %v943 = vrcp.pop %v942
    %v944 = vmul.f32 1.0, %v943
    %v945 = vxor.u32 %v936, 2147483648
    %v946 = vmul.f32 %v945, 1.442695
    %v947 = vpow.pop %v946
    %v948 = vadd.f32 %v947, 1.0
    %v949 = vrcp.pop %v948
    %v950 = vmul.f32 1.0, %v949
    %v951 = vtanh.pop %v937
    %v952 = vxor.u32 %v938, 2147483648
    %v953 = vmul.f32 %v952, 1.442695
    %v954 = vpow.pop %v953
    %v955 = vadd.f32 %v954, 1.0
    %v956 = vrcp.pop %v955
    %v957 = vmul.f32 1.0, %v956
    %v958 = vmul.f32 %v950, %v783
    %v959 = vmul.f32 %v944, %v951
    %v960 = vadd.f32 %v958, %v959
    %v961 = vtanh.pop %v960
    %v962 = vmul.f32 %v957, %v961
    %s963 = smul.u32 3, 4
    %s964 = smul.addr %s963, 8
    %s965 = scalar_lea.vmem [#allocation2], %s964
    %v966 = vld [vmem:[%s965] sm:$0xff]
    %v967 = vld [vmem:[%s965 + $0x8] sm:$0xff]
    %v968 = vld [vmem:[%s965 + $0x10] sm:$0xff]
    %v969 = vld [vmem:[%s965 + $0x18] sm:$0xff]
    %970 = vmatprep.subr.mxu0 %v436
    %971 = vmatpush1.msra.mxu0 %v435
    %972 = vmatprep.subr.mxu0 %v432
    %973 = vmatpush1.msra.mxu0 %v431
    %974 = vmatprep.subr.mxu0 %v428
    %975 = vmatpush1.msra.mxu0 %v427
    %976 = vmatprep.subr.mxu0 %v424
    %977 = vmatpush1.msra.mxu0 %v423
    %978 = vmatprep.subr.mxu0 %v420
    %979 = vmatpush1.msra.mxu0 %v419
    %980 = vmatprep.subr.mxu0 %v416
    %981 = vmatpush1.msra.mxu0 %v415
    %982 = vmatprep.subr.mxu0 %v412
    %983 = vmatpush1.msra.mxu0 %v411
    %984 = vmatprep.subr.mxu0 %v408
    %985 = vmatpush1.msra.mxu0 %v407
    %986 = vmatprep.subr.mxu0 %v404
    %987 = vmatpush1.msra.mxu0 %v403
    %988 = vmatprep.subr.mxu0 %v400
    %989 = vmatpush1.msra.mxu0 %v399
    %990 = vmatprep.subr.mxu0 %v396
    %991 = vmatpush1.msra.mxu0 %v395
    %992 = vmatprep.subr.mxu0 %v392
    %993 = vmatpush1.msra.mxu0 %v391
    %994 = vmatprep.subr.mxu0 %v388
    %995 = vmatpush1.msra.mxu0 %v387
    %996 = vmatprep.subr.mxu0 %v384
    %997 = vmatpush1.msra.mxu0 %v383
    %998 = vmatprep.subr.mxu0 %v380
    %999 = vmatpush1.msra.mxu0 %v379
    %1000 = vmatprep.subr.mxu0 %v376
    %1001 = vmatpush1.msra.mxu0 %v375
    %1002 = vmatprep.subr.mxu0 0.0
    %1003 = vmatpush2.msra.mxu0 0.0
    %1004 = vmatprep.subr.mxu0 0.0
    %1005 = vmatpush2.msra.mxu0 0.0
    %1006 = vmatprep.subr.mxu0 0.0
    %1007 = vmatpush2.msra.mxu0 0.0
    %1008 = vmatprep.subr.mxu0 0.0
    %1009 = vmatpush2.msra.mxu0 0.0
    %1010 = vmatprep.subr.mxu0 0.0
    %1011 = vmatpush2.msra.mxu0 0.0
    %1012 = vmatprep.subr.mxu0 0.0
    %1013 = vmatpush2.msra.mxu0 0.0
    %1014 = vmatprep.subr.mxu0 0.0
    %1015 = vmatpush2.msra.mxu0 0.0
    %1016 = vmatprep.subr.mxu0 0.0
    %1017 = vmatpush2.msra.mxu0 0.0
    %1018 = vmatprep.subr.mxu0 0.0
    %1019 = vmatpush2.msra.mxu0 0.0
    %1020 = vmatprep.subr.mxu0 0.0
    %1021 = vmatpush2.msra.mxu0 0.0
    %1022 = vmatprep.subr.mxu0 0.0
    %1023 = vmatpush2.msra.mxu0 0.0
    %1024 = vmatprep.subr.mxu0 0.0
    %1025 = vmatpush2.msra.mxu0 0.0
    %1026 = vmatprep.subr.mxu0 0.0
    %1027 = vmatpush2.msra.mxu0 0.0
    %1028 = vmatprep.subr.mxu0 0.0
    %1029 = vmatpush2.msra.mxu0 0.0
    %1030 = vmatprep.subr.mxu0 0.0
    %1031 = vmatpush2.msra.mxu0 0.0
    %1032 = vmatprep.subr.mxu0 0.0
    %1033 = vmatpush2.msra.mxu0 0.0
    %1034 = vmatprep.mubr.f32.mxu0 0.0
    %1035 = vmatmul.mubr.f32.gmra.mxu0 %v962
    %v1036 = vpop.f32.mrf.mxu0
    %v1037 = vadd.f32 0.0, %v1036
    %v1038 = vpop.f32.mrf.mxu0
    %v1039 = vadd.f32 0.0, %v1038
    %1040 = vdwg.mxu0
    %1041 = vmatprep.subr.mxu0 %v438
    %1042 = vmatpush1.msra.mxu0 %v437
    %1043 = vmatprep.subr.mxu0 %v434
    %1044 = vmatpush1.msra.mxu0 %v433
    %1045 = vmatprep.subr.mxu0 %v430
    %1046 = vmatpush1.msra.mxu0 %v429
    %1047 = vmatprep.subr.mxu0 %v426
    %1048 = vmatpush1.msra.mxu0 %v425
    %1049 = vmatprep.subr.mxu0 %v422
    %1050 = vmatpush1.msra.mxu0 %v421
    %1051 = vmatprep.subr.mxu0 %v418
    %1052 = vmatpush1.msra.mxu0 %v417
    %1053 = vmatprep.subr.mxu0 %v414
    %1054 = vmatpush1.msra.mxu0 %v413
    %1055 = vmatprep.subr.mxu0 %v410
    %1056 = vmatpush1.msra.mxu0 %v409
    %1057 = vmatprep.subr.mxu0 %v406
    %1058 = vmatpush1.msra.mxu0 %v405
    %1059 = vmatprep.subr.mxu0 %v402
    %1060 = vmatpush1.msra.mxu0 %v401
    %1061 = vmatprep.subr.mxu0 %v398
    %1062 = vmatpush1.msra.mxu0 %v397
    %1063 = vmatprep.subr.mxu0 %v394
    %1064 = vmatpush1.msra.mxu0 %v393
    %1065 = vmatprep.subr.mxu0 %v390
    %1066 = vmatpush1.msra.mxu0 %v389
    %1067 = vmatprep.subr.mxu0 %v386
    %1068 = vmatpush1.msra.mxu0 %v385
    %1069 = vmatprep.subr.mxu0 %v382
    %1070 = vmatpush1.msra.mxu0 %v381
    %1071 = vmatprep.subr.mxu0 %v378
    %1072 = vmatpush1.msra.mxu0 %v377
    %1073 = vmatprep.subr.mxu0 0.0
    %1074 = vmatpush2.msra.mxu0 0.0
    %1075 = vmatprep.subr.mxu0 0.0
    %1076 = vmatpush2.msra.mxu0 0.0
    %1077 = vmatprep.subr.mxu0 0.0
    %1078 = vmatpush2.msra.mxu0 0.0
    %1079 = vmatprep.subr.mxu0 0.0
    %1080 = vmatpush2.msra.mxu0 0.0
    %1081 = vmatprep.subr.mxu0 0.0
    %1082 = vmatpush2.msra.mxu0 0.0
    %1083 = vmatprep.subr.mxu0 0.0
    %1084 = vmatpush2.msra.mxu0 0.0
    %1085 = vmatprep.subr.mxu0 0.0
    %1086 = vmatpush2.msra.mxu0 0.0
    %1087 = vmatprep.subr.mxu0 0.0
    %1088 = vmatpush2.msra.mxu0 0.0
    %1089 = vmatprep.subr.mxu0 0.0
    %1090 = vmatpush2.msra.mxu0 0.0
    %1091 = vmatprep.subr.mxu0 0.0
    %1092 = vmatpush2.msra.mxu0 0.0
    %1093 = vmatprep.subr.mxu0 0.0
    %1094 = vmatpush2.msra.mxu0 0.0
    %1095 = vmatprep.subr.mxu0 0.0
    %1096 = vmatpush2.msra.mxu0 0.0
    %1097 = vmatprep.subr.mxu0 0.0
    %1098 = vmatpush2.msra.mxu0 0.0
    %1099 = vmatprep.subr.mxu0 0.0
    %1100 = vmatpush2.msra.mxu0 0.0
    %1101 = vmatprep.subr.mxu0 0.0
    %1102 = vmatpush2.msra.mxu0 0.0
    %1103 = vmatprep.subr.mxu0 0.0
    %1104 = vmatpush2.msra.mxu0 0.0
    %1105 = vmatprep.mubr.f32.mxu0 0.0
    %1106 = vmatmul.mubr.f32.gmra.mxu0 %v962
    %v1107 = vpop.f32.mrf.mxu0
    %v1108 = vadd.f32 0.0, %v1107
    %v1109 = vpop.f32.mrf.mxu0
    %v1110 = vadd.f32 0.0, %v1109
    %1111 = vdwg.mxu0
    %v1112 = vadd.f32 %v966, %v1037
    %v1113 = vadd.f32 %v967, %v1039
    %v1114 = vadd.f32 %v968, %v1108
    %v1115 = vadd.f32 %v969, %v1110
    %v1116 = vxor.u32 %v1112, 2147483648
    %v1117 = vmul.f32 %v1116, 1.442695
    %v1118 = vpow.pop %v1117
    %v1119 = vadd.f32 %v1118, 1.0
    %v1120 = vrcp.pop %v1119
    %v1121 = vmul.f32 1.0, %v1120
    %v1122 = vxor.u32 %v1113, 2147483648
    %v1123 = vmul.f32 %v1122, 1.442695
    %v1124 = vpow.pop %v1123
    %v1125 = vadd.f32 %v1124, 1.0
    %v1126 = vrcp.pop %v1125
    %v1127 = vmul.f32 1.0, %v1126
    %v1128 = vtanh.pop %v1114
    %v1129 = vxor.u32 %v1115, 2147483648
    %v1130 = vmul.f32 %v1129, 1.442695
    %v1131 = vpow.pop %v1130
    %v1132 = vadd.f32 %v1131, 1.0
    %v1133 = vrcp.pop %v1132
    %v1134 = vmul.f32 1.0, %v1133
    %v1135 = vmul.f32 %v1127, %v960
    %v1136 = vmul.f32 %v1121, %v1128
    %v1137 = vadd.f32 %v1135, %v1136
    %v1138 = vtanh.pop %v1137
    %v1139 = vmul.f32 %v1134, %v1138
    %s1140 = smul.u32 4, 4
    %s1141 = smul.addr %s1140, 8
    %s1142 = scalar_lea.vmem [#allocation2], %s1141
    %v1143 = vld [vmem:[%s1142] sm:$0xff]
    %v1144 = vld [vmem:[%s1142 + $0x8] sm:$0xff]
    %v1145 = vld [vmem:[%s1142 + $0x10] sm:$0xff]
    %v1146 = vld [vmem:[%s1142 + $0x18] sm:$0xff]
    %1147 = vmatprep.subr.mxu0 %v436
    %1148 = vmatpush1.msra.mxu0 %v435
    %1149 = vmatprep.subr.mxu0 %v432
    %1150 = vmatpush1.msra.mxu0 %v431
    %1151 = vmatprep.subr.mxu0 %v428
    %1152 = vmatpush1.msra.mxu0 %v427
    %1153 = vmatprep.subr.mxu0 %v424
    %1154 = vmatpush1.msra.mxu0 %v423
    %1155 = vmatprep.subr.mxu0 %v420
    %1156 = vmatpush1.msra.mxu0 %v419
    %1157 = vmatprep.subr.mxu0 %v416
    %1158 = vmatpush1.msra.mxu0 %v415
    %1159 = vmatprep.subr.mxu0 %v412
    %1160 = vmatpush1.msra.mxu0 %v411
    %1161 = vmatprep.subr.mxu0 %v408
    %1162 = vmatpush1.msra.mxu0 %v407
    %1163 = vmatprep.subr.mxu0 %v404
    %1164 = vmatpush1.msra.mxu0 %v403
    %1165 = vmatprep.subr.mxu0 %v400
    %1166 = vmatpush1.msra.mxu0 %v399
    %1167 = vmatprep.subr.mxu0 %v396
    %1168 = vmatpush1.msra.mxu0 %v395
    %1169 = vmatprep.subr.mxu0 %v392
    %1170 = vmatpush1.msra.mxu0 %v391
    %1171 = vmatprep.subr.mxu0 %v388
    %1172 = vmatpush1.msra.mxu0 %v387
    %1173 = vmatprep.subr.mxu0 %v384
    %1174 = vmatpush1.msra.mxu0 %v383
    %1175 = vmatprep.subr.mxu0 %v380
    %1176 = vmatpush1.msra.mxu0 %v379
    %1177 = vmatprep.subr.mxu0 %v376
    %1178 = vmatpush1.msra.mxu0 %v375
    %1179 = vmatprep.subr.mxu0 0.0
    %1180 = vmatpush2.msra.mxu0 0.0
    %1181 = vmatprep.subr.mxu0 0.0
    %1182 = vmatpush2.msra.mxu0 0.0
    %1183 = vmatprep.subr.mxu0 0.0
    %1184 = vmatpush2.msra.mxu0 0.0
    %1185 = vmatprep.subr.mxu0 0.0
    %1186 = vmatpush2.msra.mxu0 0.0
    %1187 = vmatprep.subr.mxu0 0.0
    %1188 = vmatpush2.msra.mxu0 0.0
    %1189 = vmatprep.subr.mxu0 0.0
    %1190 = vmatpush2.msra.mxu0 0.0
    %1191 = vmatprep.subr.mxu0 0.0
    %1192 = vmatpush2.msra.mxu0 0.0
    %1193 = vmatprep.subr.mxu0 0.0
    %1194 = vmatpush2.msra.mxu0 0.0
    %1195 = vmatprep.subr.mxu0 0.0
    %1196 = vmatpush2.msra.mxu0 0.0
    %1197 = vmatprep.subr.mxu0 0.0
    %1198 = vmatpush2.msra.mxu0 0.0
    %1199 = vmatprep.subr.mxu0 0.0
    %1200 = vmatpush2.msra.mxu0 0.0
    %1201 = vmatprep.subr.mxu0 0.0
    %1202 = vmatpush2.msra.mxu0 0.0
    %1203 = vmatprep.subr.mxu0 0.0
    %1204 = vmatpush2.msra.mxu0 0.0
    %1205 = vmatprep.subr.mxu0 0.0
    %1206 = vmatpush2.msra.mxu0 0.0
    %1207 = vmatprep.subr.mxu0 0.0
    %1208 = vmatpush2.msra.mxu0 0.0
    %1209 = vmatprep.subr.mxu0 0.0
    %1210 = vmatpush2.msra.mxu0 0.0
    %1211 = vmatprep.mubr.f32.mxu0 0.0
    %1212 = vmatmul.mubr.f32.gmra.mxu0 %v1139
    %v1213 = vpop.f32.mrf.mxu0
    %v1214 = vadd.f32 0.0, %v1213
    %v1215 = vpop.f32.mrf.mxu0
    %v1216 = vadd.f32 0.0, %v1215
    %1217 = vdwg.mxu0
    %1218 = vmatprep.subr.mxu0 %v438
    %1219 = vmatpush1.msra.mxu0 %v437
    %1220 = vmatprep.subr.mxu0 %v434
    %1221 = vmatpush1.msra.mxu0 %v433
    %1222 = vmatprep.subr.mxu0 %v430
    %1223 = vmatpush1.msra.mxu0 %v429
    %1224 = vmatprep.subr.mxu0 %v426
    %1225 = vmatpush1.msra.mxu0 %v425
    %1226 = vmatprep.subr.mxu0 %v422
    %1227 = vmatpush1.msra.mxu0 %v421
    %1228 = vmatprep.subr.mxu0 %v418
    %1229 = vmatpush1.msra.mxu0 %v417
    %1230 = vmatprep.subr.mxu0 %v414
    %1231 = vmatpush1.msra.mxu0 %v413
    %1232 = vmatprep.subr.mxu0 %v410
    %1233 = vmatpush1.msra.mxu0 %v409
    %1234 = vmatprep.subr.mxu0 %v406
    %1235 = vmatpush1.msra.mxu0 %v405
    %1236 = vmatprep.subr.mxu0 %v402
    %1237 = vmatpush1.msra.mxu0 %v401
    %1238 = vmatprep.subr.mxu0 %v398
    %1239 = vmatpush1.msra.mxu0 %v397
    %1240 = vmatprep.subr.mxu0 %v394
    %1241 = vmatpush1.msra.mxu0 %v393
    %1242 = vmatprep.subr.mxu0 %v390
    %1243 = vmatpush1.msra.mxu0 %v389
    %1244 = vmatprep.subr.mxu0 %v386
    %1245 = vmatpush1.msra.mxu0 %v385
    %1246 = vmatprep.subr.mxu0 %v382
    %1247 = vmatpush1.msra.mxu0 %v381
    %1248 = vmatprep.subr.mxu0 %v378
    %1249 = vmatpush1.msra.mxu0 %v377
    %1250 = vmatprep.subr.mxu0 0.0
    %1251 = vmatpush2.msra.mxu0 0.0
    %1252 = vmatprep.subr.mxu0 0.0
    %1253 = vmatpush2.msra.mxu0 0.0
    %1254 = vmatprep.subr.mxu0 0.0
    %1255 = vmatpush2.msra.mxu0 0.0
    %1256 = vmatprep.subr.mxu0 0.0
    %1257 = vmatpush2.msra.mxu0 0.0
    %1258 = vmatprep.subr.mxu0 0.0
    %1259 = vmatpush2.msra.mxu0 0.0
    %1260 = vmatprep.subr.mxu0 0.0
    %1261 = vmatpush2.msra.mxu0 0.0
    %1262 = vmatprep.subr.mxu0 0.0
    %1263 = vmatpush2.msra.mxu0 0.0
    %1264 = vmatprep.subr.mxu0 0.0
    %1265 = vmatpush2.msra.mxu0 0.0
    %1266 = vmatprep.subr.mxu0 0.0
    %1267 = vmatpush2.msra.mxu0 0.0
    %1268 = vmatprep.subr.mxu0 0.0
    %1269 = vmatpush2.msra.mxu0 0.0
    %1270 = vmatprep.subr.mxu0 0.0
    %1271 = vmatpush2.msra.mxu0 0.0
    %1272 = vmatprep.subr.mxu0 0.0
    %1273 = vmatpush2.msra.mxu0 0.0
    %1274 = vmatprep.subr.mxu0 0.0
    %1275 = vmatpush2.msra.mxu0 0.0
    %1276 = vmatprep.subr.mxu0 0.0
    %1277 = vmatpush2.msra.mxu0 0.0
    %1278 = vmatprep.subr.mxu0 0.0
    %1279 = vmatpush2.msra.mxu0 0.0
    %1280 = vmatprep.subr.mxu0 0.0
    %1281 = vmatpush2.msra.mxu0 0.0
    %1282 = vmatprep.mubr.f32.mxu0 0.0
    %1283 = vmatmul.mubr.f32.gmra.mxu0 %v1139
    %v1284 = vpop.f32.mrf.mxu0
    %v1285 = vadd.f32 0.0, %v1284
    %v1286 = vpop.f32.mrf.mxu0
    %v1287 = vadd.f32 0.0, %v1286
    %1288 = vdwg.mxu0
    %v1289 = vadd.f32 %v1143, %v1214
    %v1290 = vadd.f32 %v1144, %v1216
    %v1291 = vadd.f32 %v1145, %v1285
    %v1292 = vadd.f32 %v1146, %v1287
    %v1293 = vxor.u32 %v1289, 2147483648
    %v1294 = vmul.f32 %v1293, 1.442695
    %v1295 = vpow.pop %v1294
    %v1296 = vadd.f32 %v1295, 1.0
    %v1297 = vrcp.pop %v1296
    %v1298 = vmul.f32 1.0, %v1297
    %v1299 = vxor.u32 %v1290, 2147483648
    %v1300 = vmul.f32 %v1299, 1.442695
    %v1301 = vpow.pop %v1300
    %v1302 = vadd.f32 %v1301, 1.0
    %v1303 = vrcp.pop %v1302
    %v1304 = vmul.f32 1.0, %v1303
    %v1305 = vtanh.pop %v1291
    %v1306 = vxor.u32 %v1292, 2147483648
    %v1307 = vmul.f32 %v1306, 1.442695
    %v1308 = vpow.pop %v1307
    %v1309 = vadd.f32 %v1308, 1.0
    %v1310 = vrcp.pop %v1309
    %v1311 = vmul.f32 1.0, %v1310
    %v1312 = vmul.f32 %v1304, %v1137
    %v1313 = vmul.f32 %v1298, %v1305
    %v1314 = vadd.f32 %v1312, %v1313
    %v1315 = vtanh.pop %v1314
    %v1316 = vmul.f32 %v1311, %v1315
    %s1317 = smul.u32 5, 4
    %s1318 = smul.addr %s1317, 8
    %s1319 = scalar_lea.vmem [#allocation2], %s1318
    %v1320 = vld [vmem:[%s1319] sm:$0xff]
    %v1321 = vld [vmem:[%s1319 + $0x8] sm:$0xff]
    %v1322 = vld [vmem:[%s1319 + $0x10] sm:$0xff]
    %v1323 = vld [vmem:[%s1319 + $0x18] sm:$0xff]
    %1324 = vmatprep.subr.mxu0 %v436
    %1325 = vmatpush1.msra.mxu0 %v435
    %1326 = vmatprep.subr.mxu0 %v432
    %1327 = vmatpush1.msra.mxu0 %v431
    %1328 = vmatprep.subr.mxu0 %v428
    %1329 = vmatpush1.msra.mxu0 %v427
    %1330 = vmatprep.subr.mxu0 %v424
    %1331 = vmatpush1.msra.mxu0 %v423
    %1332 = vmatprep.subr.mxu0 %v420
    %1333 = vmatpush1.msra.mxu0 %v419
    %1334 = vmatprep.subr.mxu0 %v416
    %1335 = vmatpush1.msra.mxu0 %v415
    %1336 = vmatprep.subr.mxu0 %v412
    %1337 = vmatpush1.msra.mxu0 %v411
    %1338 = vmatprep.subr.mxu0 %v408
    %1339 = vmatpush1.msra.mxu0 %v407
    %1340 = vmatprep.subr.mxu0 %v404
    %1341 = vmatpush1.msra.mxu0 %v403
    %1342 = vmatprep.subr.mxu0 %v400
    %1343 = vmatpush1.msra.mxu0 %v399
    %1344 = vmatprep.subr.mxu0 %v396
    %1345 = vmatpush1.msra.mxu0 %v395
    %1346 = vmatprep.subr.mxu0 %v392
    %1347 = vmatpush1.msra.mxu0 %v391
    %1348 = vmatprep.subr.mxu0 %v388
    %1349 = vmatpush1.msra.mxu0 %v387
    %1350 = vmatprep.subr.mxu0 %v384
    %1351 = vmatpush1.msra.mxu0 %v383
    %1352 = vmatprep.subr.mxu0 %v380
    %1353 = vmatpush1.msra.mxu0 %v379
    %1354 = vmatprep.subr.mxu0 %v376
    %1355 = vmatpush1.msra.mxu0 %v375
    %1356 = vmatprep.subr.mxu0 0.0
    %1357 = vmatpush2.msra.mxu0 0.0
    %1358 = vmatprep.subr.mxu0 0.0
    %1359 = vmatpush2.msra.mxu0 0.0
    %1360 = vmatprep.subr.mxu0 0.0
    %1361 = vmatpush2.msra.mxu0 0.0
    %1362 = vmatprep.subr.mxu0 0.0
    %1363 = vmatpush2.msra.mxu0 0.0
    %1364 = vmatprep.subr.mxu0 0.0
    %1365 = vmatpush2.msra.mxu0 0.0
    %1366 = vmatprep.subr.mxu0 0.0
    %1367 = vmatpush2.msra.mxu0 0.0
    %1368 = vmatprep.subr.mxu0 0.0
    %1369 = vmatpush2.msra.mxu0 0.0
    %1370 = vmatprep.subr.mxu0 0.0
    %1371 = vmatpush2.msra.mxu0 0.0
    %1372 = vmatprep.subr.mxu0 0.0
    %1373 = vmatpush2.msra.mxu0 0.0
    %1374 = vmatprep.subr.mxu0 0.0
    %1375 = vmatpush2.msra.mxu0 0.0
    %1376 = vmatprep.subr.mxu0 0.0
    %1377 = vmatpush2.msra.mxu0 0.0
    %1378 = vmatprep.subr.mxu0 0.0
    %1379 = vmatpush2.msra.mxu0 0.0
    %1380 = vmatprep.subr.mxu0 0.0
    %1381 = vmatpush2.msra.mxu0 0.0
    %1382 = vmatprep.subr.mxu0 0.0
    %1383 = vmatpush2.msra.mxu0 0.0
    %1384 = vmatprep.subr.mxu0 0.0
    %1385 = vmatpush2.msra.mxu0 0.0
    %1386 = vmatprep.subr.mxu0 0.0
    %1387 = vmatpush2.msra.mxu0 0.0
    %1388 = vmatprep.mubr.f32.mxu0 0.0
    %1389 = vmatmul.mubr.f32.gmra.mxu0 %v1316
    %v1390 = vpop.f32.mrf.mxu0
    %v1391 = vadd.f32 0.0, %v1390
    %v1392 = vpop.f32.mrf.mxu0
    %v1393 = vadd.f32 0.0, %v1392
    %1394 = vdwg.mxu0
    %1395 = vmatprep.subr.mxu0 %v438
    %1396 = vmatpush1.msra.mxu0 %v437
    %1397 = vmatprep.subr.mxu0 %v434
    %1398 = vmatpush1.msra.mxu0 %v433
    %1399 = vmatprep.subr.mxu0 %v430
    %1400 = vmatpush1.msra.mxu0 %v429
    %1401 = vmatprep.subr.mxu0 %v426
    %1402 = vmatpush1.msra.mxu0 %v425
    %1403 = vmatprep.subr.mxu0 %v422
    %1404 = vmatpush1.msra.mxu0 %v421
    %1405 = vmatprep.subr.mxu0 %v418
    %1406 = vmatpush1.msra.mxu0 %v417
    %1407 = vmatprep.subr.mxu0 %v414
    %1408 = vmatpush1.msra.mxu0 %v413
    %1409 = vmatprep.subr.mxu0 %v410
    %1410 = vmatpush1.msra.mxu0 %v409
    %1411 = vmatprep.subr.mxu0 %v406
    %1412 = vmatpush1.msra.mxu0 %v405
    %1413 = vmatprep.subr.mxu0 %v402
    %1414 = vmatpush1.msra.mxu0 %v401
    %1415 = vmatprep.subr.mxu0 %v398
    %1416 = vmatpush1.msra.mxu0 %v397
    %1417 = vmatprep.subr.mxu0 %v394
    %1418 = vmatpush1.msra.mxu0 %v393
    %1419 = vmatprep.subr.mxu0 %v390
    %1420 = vmatpush1.msra.mxu0 %v389
    %1421 = vmatprep.subr.mxu0 %v386
    %1422 = vmatpush1.msra.mxu0 %v385
    %1423 = vmatprep.subr.mxu0 %v382
    %1424 = vmatpush1.msra.mxu0 %v381
    %1425 = vmatprep.subr.mxu0 %v378
    %1426 = vmatpush1.msra.mxu0 %v377
    %1427 = vmatprep.subr.mxu0 0.0
    %1428 = vmatpush2.msra.mxu0 0.0
    %1429 = vmatprep.subr.mxu0 0.0
    %1430 = vmatpush2.msra.mxu0 0.0
    %1431 = vmatprep.subr.mxu0 0.0
    %1432 = vmatpush2.msra.mxu0 0.0
    %1433 = vmatprep.subr.mxu0 0.0
    %1434 = vmatpush2.msra.mxu0 0.0
    %1435 = vmatprep.subr.mxu0 0.0
    %1436 = vmatpush2.msra.mxu0 0.0
    %1437 = vmatprep.subr.mxu0 0.0
    %1438 = vmatpush2.msra.mxu0 0.0
    %1439 = vmatprep.subr.mxu0 0.0
    %1440 = vmatpush2.msra.mxu0 0.0
    %1441 = vmatprep.subr.mxu0 0.0
    %1442 = vmatpush2.msra.mxu0 0.0
    %1443 = vmatprep.subr.mxu0 0.0
    %1444 = vmatpush2.msra.mxu0 0.0
    %1445 = vmatprep.subr.mxu0 0.0
    %1446 = vmatpush2.msra.mxu0 0.0
    %1447 = vmatprep.subr.mxu0 0.0
    %1448 = vmatpush2.msra.mxu0 0.0
    %1449 = vmatprep.subr.mxu0 0.0
    %1450 = vmatpush2.msra.mxu0 0.0
    %1451 = vmatprep.subr.mxu0 0.0
    %1452 = vmatpush2.msra.mxu0 0.0
    %1453 = vmatprep.subr.mxu0 0.0
    %1454 = vmatpush2.msra.mxu0 0.0
    %1455 = vmatprep.subr.mxu0 0.0
    %1456 = vmatpush2.msra.mxu0 0.0
    %1457 = vmatprep.subr.mxu0 0.0
    %1458 = vmatpush2.msra.mxu0 0.0
    %1459 = vmatprep.mubr.f32.mxu0 0.0
    %1460 = vmatmul.mubr.f32.gmra.mxu0 %v1316
    %v1461 = vpop.f32.mrf.mxu0
    %v1462 = vadd.f32 0.0, %v1461
    %v1463 = vpop.f32.mrf.mxu0
    %v1464 = vadd.f32 0.0, %v1463
    %1465 = vdwg.mxu0
    %v1466 = vadd.f32 %v1320, %v1391
    %v1467 = vadd.f32 %v1321, %v1393
    %v1468 = vadd.f32 %v1322, %v1462
    %v1469 = vadd.f32 %v1323, %v1464
    %v1470 = vxor.u32 %v1466, 2147483648
    %v1471 = vmul.f32 %v1470, 1.442695
    %v1472 = vpow.pop %v1471
    %v1473 = vadd.f32 %v1472, 1.0
    %v1474 = vrcp.pop %v1473
    %v1475 = vmul.f32 1.0, %v1474
    %v1476 = vxor.u32 %v1467, 2147483648
    %v1477 = vmul.f32 %v1476, 1.442695
    %v1478 = vpow.pop %v1477
    %v1479 = vadd.f32 %v1478, 1.0
    %v1480 = vrcp.pop %v1479
    %v1481 = vmul.f32 1.0, %v1480
    %v1482 = vtanh.pop %v1468
    %v1483 = vxor.u32 %v1469, 2147483648
    %v1484 = vmul.f32 %v1483, 1.442695
    %v1485 = vpow.pop %v1484
    %v1486 = vadd.f32 %v1485, 1.0
    %v1487 = vrcp.pop %v1486
    %v1488 = vmul.f32 1.0, %v1487
    %v1489 = vmul.f32 %v1481, %v1314
    %v1490 = vmul.f32 %v1475, %v1482
    %v1491 = vadd.f32 %v1489, %v1490
    %v1492 = vtanh.pop %v1491
    %v1493 = vmul.f32 %v1488, %v1492
    %s1494 = smul.u32 6, 4
    %s1495 = smul.addr %s1494, 8
    %s1496 = scalar_lea.vmem [#allocation2], %s1495
    %v1497 = vld [vmem:[%s1496] sm:$0xff]
    %v1498 = vld [vmem:[%s1496 + $0x8] sm:$0xff]
    %v1499 = vld [vmem:[%s1496 + $0x10] sm:$0xff]
    %v1500 = vld [vmem:[%s1496 + $0x18] sm:$0xff]
    %1501 = vmatprep.subr.mxu0 %v436
    %1502 = vmatpush1.msra.mxu0 %v435
    %1503 = vmatprep.subr.mxu0 %v432
    %1504 = vmatpush1.msra.mxu0 %v431
    %1505 = vmatprep.subr.mxu0 %v428
    %1506 = vmatpush1.msra.mxu0 %v427
    %1507 = vmatprep.subr.mxu0 %v424
    %1508 = vmatpush1.msra.mxu0 %v423
    %1509 = vmatprep.subr.mxu0 %v420
    %1510 = vmatpush1.msra.mxu0 %v419
    %1511 = vmatprep.subr.mxu0 %v416
    %1512 = vmatpush1.msra.mxu0 %v415
    %1513 = vmatprep.subr.mxu0 %v412
    %1514 = vmatpush1.msra.mxu0 %v411
    %1515 = vmatprep.subr.mxu0 %v408
    %1516 = vmatpush1.msra.mxu0 %v407
    %1517 = vmatprep.subr.mxu0 %v404
    %1518 = vmatpush1.msra.mxu0 %v403
    %1519 = vmatprep.subr.mxu0 %v400
    %1520 = vmatpush1.msra.mxu0 %v399
    %1521 = vmatprep.subr.mxu0 %v396
    %1522 = vmatpush1.msra.mxu0 %v395
    %1523 = vmatprep.subr.mxu0 %v392
    %1524 = vmatpush1.msra.mxu0 %v391
    %1525 = vmatprep.subr.mxu0 %v388
    %1526 = vmatpush1.msra.mxu0 %v387
    %1527 = vmatprep.subr.mxu0 %v384
    %1528 = vmatpush1.msra.mxu0 %v383
    %1529 = vmatprep.subr.mxu0 %v380
    %1530 = vmatpush1.msra.mxu0 %v379
    %1531 = vmatprep.subr.mxu0 %v376
    %1532 = vmatpush1.msra.mxu0 %v375
    %1533 = vmatprep.subr.mxu0 0.0
    %1534 = vmatpush2.msra.mxu0 0.0
    %1535 = vmatprep.subr.mxu0 0.0
    %1536 = vmatpush2.msra.mxu0 0.0
    %1537 = vmatprep.subr.mxu0 0.0
    %1538 = vmatpush2.msra.mxu0 0.0
    %1539 = vmatprep.subr.mxu0 0.0
    %1540 = vmatpush2.msra.mxu0 0.0
    %1541 = vmatprep.subr.mxu0 0.0
    %1542 = vmatpush2.msra.mxu0 0.0
    %1543 = vmatprep.subr.mxu0 0.0
    %1544 = vmatpush2.msra.mxu0 0.0
    %1545 = vmatprep.subr.mxu0 0.0
    %1546 = vmatpush2.msra.mxu0 0.0
    %1547 = vmatprep.subr.mxu0 0.0
    %1548 = vmatpush2.msra.mxu0 0.0
    %1549 = vmatprep.subr.mxu0 0.0
    %1550 = vmatpush2.msra.mxu0 0.0
    %1551 = vmatprep.subr.mxu0 0.0
    %1552 = vmatpush2.msra.mxu0 0.0
    %1553 = vmatprep.subr.mxu0 0.0
    %1554 = vmatpush2.msra.mxu0 0.0
    %1555 = vmatprep.subr.mxu0 0.0
    %1556 = vmatpush2.msra.mxu0 0.0
    %1557 = vmatprep.subr.mxu0 0.0
    %1558 = vmatpush2.msra.mxu0 0.0
    %1559 = vmatprep.subr.mxu0 0.0
    %1560 = vmatpush2.msra.mxu0 0.0
    %1561 = vmatprep.subr.mxu0 0.0
    %1562 = vmatpush2.msra.mxu0 0.0
    %1563 = vmatprep.subr.mxu0 0.0
    %1564 = vmatpush2.msra.mxu0 0.0
    %1565 = vmatprep.mubr.f32.mxu0 0.0
    %1566 = vmatmul.mubr.f32.gmra.mxu0 %v1493
    %v1567 = vpop.f32.mrf.mxu0
    %v1568 = vadd.f32 0.0, %v1567
    %v1569 = vpop.f32.mrf.mxu0
    %v1570 = vadd.f32 0.0, %v1569
    %1571 = vdwg.mxu0
    %1572 = vmatprep.subr.mxu0 %v438
    %1573 = vmatpush1.msra.mxu0 %v437
    %1574 = vmatprep.subr.mxu0 %v434
    %1575 = vmatpush1.msra.mxu0 %v433
    %1576 = vmatprep.subr.mxu0 %v430
    %1577 = vmatpush1.msra.mxu0 %v429
    %1578 = vmatprep.subr.mxu0 %v426
    %1579 = vmatpush1.msra.mxu0 %v425
    %1580 = vmatprep.subr.mxu0 %v422
    %1581 = vmatpush1.msra.mxu0 %v421
    %1582 = vmatprep.subr.mxu0 %v418
    %1583 = vmatpush1.msra.mxu0 %v417
    %1584 = vmatprep.subr.mxu0 %v414
    %1585 = vmatpush1.msra.mxu0 %v413
    %1586 = vmatprep.subr.mxu0 %v410
    %1587 = vmatpush1.msra.mxu0 %v409
    %1588 = vmatprep.subr.mxu0 %v406
    %1589 = vmatpush1.msra.mxu0 %v405
    %1590 = vmatprep.subr.mxu0 %v402
    %1591 = vmatpush1.msra.mxu0 %v401
    %1592 = vmatprep.subr.mxu0 %v398
    %1593 = vmatpush1.msra.mxu0 %v397
    %1594 = vmatprep.subr.mxu0 %v394
    %1595 = vmatpush1.msra.mxu0 %v393
    %1596 = vmatprep.subr.mxu0 %v390
    %1597 = vmatpush1.msra.mxu0 %v389
    %1598 = vmatprep.subr.mxu0 %v386
    %1599 = vmatpush1.msra.mxu0 %v385
    %1600 = vmatprep.subr.mxu0 %v382
    %1601 = vmatpush1.msra.mxu0 %v381
    %1602 = vmatprep.subr.mxu0 %v378
    %1603 = vmatpush1.msra.mxu0 %v377
    %1604 = vmatprep.subr.mxu0 0.0
    %1605 = vmatpush2.msra.mxu0 0.0
    %1606 = vmatprep.subr.mxu0 0.0
    %1607 = vmatpush2.msra.mxu0 0.0
    %1608 = vmatprep.subr.mxu0 0.0
    %1609 = vmatpush2.msra.mxu0 0.0
    %1610 = vmatprep.subr.mxu0 0.0
    %1611 = vmatpush2.msra.mxu0 0.0
    %1612 = vmatprep.subr.mxu0 0.0
    %1613 = vmatpush2.msra.mxu0 0.0
    %1614 = vmatprep.subr.mxu0 0.0
    %1615 = vmatpush2.msra.mxu0 0.0
    %1616 = vmatprep.subr.mxu0 0.0
    %1617 = vmatpush2.msra.mxu0 0.0
    %1618 = vmatprep.subr.mxu0 0.0
    %1619 = vmatpush2.msra.mxu0 0.0
    %1620 = vmatprep.subr.mxu0 0.0
    %1621 = vmatpush2.msra.mxu0 0.0
    %1622 = vmatprep.subr.mxu0 0.0
    %1623 = vmatpush2.msra.mxu0 0.0
    %1624 = vmatprep.subr.mxu0 0.0
    %1625 = vmatpush2.msra.mxu0 0.0
    %1626 = vmatprep.subr.mxu0 0.0
    %1627 = vmatpush2.msra.mxu0 0.0
    %1628 = vmatprep.subr.mxu0 0.0
    %1629 = vmatpush2.msra.mxu0 0.0
    %1630 = vmatprep.subr.mxu0 0.0
    %1631 = vmatpush2.msra.mxu0 0.0
    %1632 = vmatprep.subr.mxu0 0.0
    %1633 = vmatpush2.msra.mxu0 0.0
    %1634 = vmatprep.subr.mxu0 0.0
    %1635 = vmatpush2.msra.mxu0 0.0
    %1636 = vmatprep.mubr.f32.mxu0 0.0
    %1637 = vmatmul.mubr.f32.gmra.mxu0 %v1493
    %v1638 = vpop.f32.mrf.mxu0
    %v1639 = vadd.f32 0.0, %v1638
    %v1640 = vpop.f32.mrf.mxu0
    %v1641 = vadd.f32 0.0, %v1640
    %1642 = vdwg.mxu0
    %v1643 = vadd.f32 %v1497, %v1568
    %v1644 = vadd.f32 %v1498, %v1570
    %v1645 = vadd.f32 %v1499, %v1639
    %v1646 = vadd.f32 %v1500, %v1641
    %v1647 = vxor.u32 %v1643, 2147483648
    %v1648 = vmul.f32 %v1647, 1.442695
    %v1649 = vpow.pop %v1648
    %v1650 = vadd.f32 %v1649, 1.0
    %v1651 = vrcp.pop %v1650
    %v1652 = vmul.f32 1.0, %v1651
    %v1653 = vxor.u32 %v1644, 2147483648
    %v1654 = vmul.f32 %v1653, 1.442695
    %v1655 = vpow.pop %v1654
    %v1656 = vadd.f32 %v1655, 1.0
    %v1657 = vrcp.pop %v1656
    %v1658 = vmul.f32 1.0, %v1657
    %v1659 = vtanh.pop %v1645
    %v1660 = vxor.u32 %v1646, 2147483648
    %v1661 = vmul.f32 %v1660, 1.442695
    %v1662 = vpow.pop %v1661
    %v1663 = vadd.f32 %v1662, 1.0
    %v1664 = vrcp.pop %v1663
    %v1665 = vmul.f32 1.0, %v1664
    %v1666 = vmul.f32 %v1658, %v1491
    %v1667 = vmul.f32 %v1652, %v1659
    %v1668 = vadd.f32 %v1666, %v1667
    %v1669 = vtanh.pop %v1668
    %v1670 = vmul.f32 %v1665, %v1669
    %s1671 = smul.u32 7, 4
    %s1672 = smul.addr %s1671, 8
    %s1673 = scalar_lea.vmem [#allocation2], %s1672
    %v1674 = vld [vmem:[%s1673] sm:$0xff]
    %v1675 = vld [vmem:[%s1673 + $0x8] sm:$0xff]
    %v1676 = vld [vmem:[%s1673 + $0x10] sm:$0xff]
    %v1677 = vld [vmem:[%s1673 + $0x18] sm:$0xff]
    %1678 = vmatprep.subr.mxu0 %v436
    %1679 = vmatpush1.msra.mxu0 %v435
    %1680 = vmatprep.subr.mxu0 %v432
    %1681 = vmatpush1.msra.mxu0 %v431
    %1682 = vmatprep.subr.mxu0 %v428
    %1683 = vmatpush1.msra.mxu0 %v427
    %1684 = vmatprep.subr.mxu0 %v424
    %1685 = vmatpush1.msra.mxu0 %v423
    %1686 = vmatprep.subr.mxu0 %v420
    %1687 = vmatpush1.msra.mxu0 %v419
    %1688 = vmatprep.subr.mxu0 %v416
    %1689 = vmatpush1.msra.mxu0 %v415
    %1690 = vmatprep.subr.mxu0 %v412
    %1691 = vmatpush1.msra.mxu0 %v411
    %1692 = vmatprep.subr.mxu0 %v408
    %1693 = vmatpush1.msra.mxu0 %v407
    %1694 = vmatprep.subr.mxu0 %v404
    %1695 = vmatpush1.msra.mxu0 %v403
    %1696 = vmatprep.subr.mxu0 %v400
    %1697 = vmatpush1.msra.mxu0 %v399
    %1698 = vmatprep.subr.mxu0 %v396
    %1699 = vmatpush1.msra.mxu0 %v395
    %1700 = vmatprep.subr.mxu0 %v392
    %1701 = vmatpush1.msra.mxu0 %v391
    %1702 = vmatprep.subr.mxu0 %v388
    %1703 = vmatpush1.msra.mxu0 %v387
    %1704 = vmatprep.subr.mxu0 %v384
    %1705 = vmatpush1.msra.mxu0 %v383
    %1706 = vmatprep.subr.mxu0 %v380
    %1707 = vmatpush1.msra.mxu0 %v379
    %1708 = vmatprep.subr.mxu0 %v376
    %1709 = vmatpush1.msra.mxu0 %v375
    %1710 = vmatprep.subr.mxu0 0.0
    %1711 = vmatpush2.msra.mxu0 0.0
    %1712 = vmatprep.subr.mxu0 0.0
    %1713 = vmatpush2.msra.mxu0 0.0
    %1714 = vmatprep.subr.mxu0 0.0
    %1715 = vmatpush2.msra.mxu0 0.0
    %1716 = vmatprep.subr.mxu0 0.0
    %1717 = vmatpush2.msra.mxu0 0.0
    %1718 = vmatprep.subr.mxu0 0.0
    %1719 = vmatpush2.msra.mxu0 0.0
    %1720 = vmatprep.subr.mxu0 0.0
    %1721 = vmatpush2.msra.mxu0 0.0
    %1722 = vmatprep.subr.mxu0 0.0
    %1723 = vmatpush2.msra.mxu0 0.0
    %1724 = vmatprep.subr.mxu0 0.0
    %1725 = vmatpush2.msra.mxu0 0.0
    %1726 = vmatprep.subr.mxu0 0.0
    %1727 = vmatpush2.msra.mxu0 0.0
    %1728 = vmatprep.subr.mxu0 0.0
    %1729 = vmatpush2.msra.mxu0 0.0
    %1730 = vmatprep.subr.mxu0 0.0
    %1731 = vmatpush2.msra.mxu0 0.0
    %1732 = vmatprep.subr.mxu0 0.0
    %1733 = vmatpush2.msra.mxu0 0.0
    %1734 = vmatprep.subr.mxu0 0.0
    %1735 = vmatpush2.msra.mxu0 0.0
    %1736 = vmatprep.subr.mxu0 0.0
    %1737 = vmatpush2.msra.mxu0 0.0
    %1738 = vmatprep.subr.mxu0 0.0
    %1739 = vmatpush2.msra.mxu0 0.0
    %1740 = vmatprep.subr.mxu0 0.0
    %1741 = vmatpush2.msra.mxu0 0.0
    %1742 = vmatprep.mubr.f32.mxu0 0.0
    %1743 = vmatmul.mubr.f32.gmra.mxu0 %v1670
    %v1744 = vpop.f32.mrf.mxu0
    %v1745 = vadd.f32 0.0, %v1744
    %v1746 = vpop.f32.mrf.mxu0
    %v1747 = vadd.f32 0.0, %v1746
    %1748 = vdwg.mxu0
    %1749 = vmatprep.subr.mxu0 %v438
    %1750 = vmatpush1.msra.mxu0 %v437
    %1751 = vmatprep.subr.mxu0 %v434
    %1752 = vmatpush1.msra.mxu0 %v433
    %1753 = vmatprep.subr.mxu0 %v430
    %1754 = vmatpush1.msra.mxu0 %v429
    %1755 = vmatprep.subr.mxu0 %v426
    %1756 = vmatpush1.msra.mxu0 %v425
    %1757 = vmatprep.subr.mxu0 %v422
    %1758 = vmatpush1.msra.mxu0 %v421
    %1759 = vmatprep.subr.mxu0 %v418
    %1760 = vmatpush1.msra.mxu0 %v417
    %1761 = vmatprep.subr.mxu0 %v414
    %1762 = vmatpush1.msra.mxu0 %v413
    %1763 = vmatprep.subr.mxu0 %v410
    %1764 = vmatpush1.msra.mxu0 %v409
    %1765 = vmatprep.subr.mxu0 %v406
    %1766 = vmatpush1.msra.mxu0 %v405
    %1767 = vmatprep.subr.mxu0 %v402
    %1768 = vmatpush1.msra.mxu0 %v401
    %1769 = vmatprep.subr.mxu0 %v398
    %1770 = vmatpush1.msra.mxu0 %v397
    %1771 = vmatprep.subr.mxu0 %v394
    %1772 = vmatpush1.msra.mxu0 %v393
    %1773 = vmatprep.subr.mxu0 %v390
    %1774 = vmatpush1.msra.mxu0 %v389
    %1775 = vmatprep.subr.mxu0 %v386
    %1776 = vmatpush1.msra.mxu0 %v385
    %1777 = vmatprep.subr.mxu0 %v382
    %1778 = vmatpush1.msra.mxu0 %v381
    %1779 = vmatprep.subr.mxu0 %v378
    %1780 = vmatpush1.msra.mxu0 %v377
    %1781 = vmatprep.subr.mxu0 0.0
    %1782 = vmatpush2.msra.mxu0 0.0
    %1783 = vmatprep.subr.mxu0 0.0
    %1784 = vmatpush2.msra.mxu0 0.0
    %1785 = vmatprep.subr.mxu0 0.0
    %1786 = vmatpush2.msra.mxu0 0.0
    %1787 = vmatprep.subr.mxu0 0.0
    %1788 = vmatpush2.msra.mxu0 0.0
    %1789 = vmatprep.subr.mxu0 0.0
    %1790 = vmatpush2.msra.mxu0 0.0
    %1791 = vmatprep.subr.mxu0 0.0
    %1792 = vmatpush2.msra.mxu0 0.0
    %1793 = vmatprep.subr.mxu0 0.0
    %1794 = vmatpush2.msra.mxu0 0.0
    %1795 = vmatprep.subr.mxu0 0.0
    %1796 = vmatpush2.msra.mxu0 0.0
    %1797 = vmatprep.subr.mxu0 0.0
    %1798 = vmatpush2.msra.mxu0 0.0
    %1799 = vmatprep.subr.mxu0 0.0
    %1800 = vmatpush2.msra.mxu0 0.0
    %1801 = vmatprep.subr.mxu0 0.0
    %1802 = vmatpush2.msra.mxu0 0.0
    %1803 = vmatprep.subr.mxu0 0.0
    %1804 = vmatpush2.msra.mxu0 0.0
    %1805 = vmatprep.subr.mxu0 0.0
    %1806 = vmatpush2.msra.mxu0 0.0
    %1807 = vmatprep.subr.mxu0 0.0
    %1808 = vmatpush2.msra.mxu0 0.0
    %1809 = vmatprep.subr.mxu0 0.0
    %1810 = vmatpush2.msra.mxu0 0.0
    %1811 = vmatprep.subr.mxu0 0.0
    %1812 = vmatpush2.msra.mxu0 0.0
    %1813 = vmatprep.mubr.f32.mxu0 0.0
    %1814 = vmatmul.mubr.f32.gmra.mxu0 %v1670
    %v1815 = vpop.f32.mrf.mxu0
    %v1816 = vadd.f32 0.0, %v1815
    %v1817 = vpop.f32.mrf.mxu0
    %v1818 = vadd.f32 0.0, %v1817
    %1819 = vdwg.mxu0
    %v1820 = vadd.f32 %v1674, %v1745
    %v1821 = vadd.f32 %v1675, %v1747
    %v1822 = vadd.f32 %v1676, %v1816
    %v1823 = vadd.f32 %v1677, %v1818
    %v1824 = vxor.u32 %v1820, 2147483648
    %v1825 = vmul.f32 %v1824, 1.442695
    %v1826 = vpow.pop %v1825
    %v1827 = vadd.f32 %v1826, 1.0
    %v1828 = vrcp.pop %v1827
    %v1829 = vmul.f32 1.0, %v1828
    %v1830 = vxor.u32 %v1821, 2147483648
    %v1831 = vmul.f32 %v1830, 1.442695
    %v1832 = vpow.pop %v1831
    %v1833 = vadd.f32 %v1832, 1.0
    %v1834 = vrcp.pop %v1833
    %v1835 = vmul.f32 1.0, %v1834
    %v1836 = vtanh.pop %v1822
    %v1837 = vxor.u32 %v1823, 2147483648
    %v1838 = vmul.f32 %v1837, 1.442695
    %v1839 = vpow.pop %v1838
    %v1840 = vadd.f32 %v1839, 1.0
    %v1841 = vrcp.pop %v1840
    %v1842 = vmul.f32 1.0, %v1841
    %v1843 = vmul.f32 %v1835, %v1668
    %v1844 = vmul.f32 %v1829, %v1836
    %v1845 = vadd.f32 %v1843, %v1844
    %v1846 = vtanh.pop %v1845
    %v1847 = vmul.f32 %v1842, %v1846
    %1848 = vst [vmem:[#allocation3] sm:$0xff] %v1847
    %1849 = vst [vmem:[#allocation4] sm:$0xff] %v1845
    // Predicated region
    $region26: #{tpu_custom_call.1} parent=1 // pred_check
      %p1850 = pneg %p32
    $region27: #{tpu_custom_call.1} parent=1 // pred_check_branch
      %1852 = sbr.rel (%p1850) target = $region29
    $region28: #{tpu_custom_call.1} parent=1 // pred_region
      %1853 = vst [vmem:[#allocation8] sm:$0xff] %v1847
    $region29: #{tpu_custom_call.1} parent=1 // pred_fallthru
      _
    // Predicated region
    $region30: #{tpu_custom_call.1} parent=1 // pred_check
      _
    $region31: #{tpu_custom_call.1} parent=1 // pred_check_branch
      %1855 = sbr.rel (0) target = $region33
    $region32: #{tpu_custom_call.1} parent=1 // pred_region
      %s1857 = ssub.s32 128, 128
      %1858 = vsyncadd [#allocation7], %s1857
      %s1860 = sshll.u32 [#allocation8], 4
      %s1861 = int_to_ptr.vmem [resolvable:$true] %s1860
      %1863 = dma.vmem_to_hbm [thread:$0]  %s1861, 128, %s4, [#allocation7]
    $region33: #{tpu_custom_call.1} parent=1 // pred_fallthru
      _
    // Predicated region
    $region34: #{tpu_custom_call.1} parent=1 // pred_check
      _
    $region35: #{tpu_custom_call.1} parent=1 // pred_check_branch
      %1865 = sbr.rel (0) target = $region37
    $region36: #{tpu_custom_call.1} parent=1 // pred_region
      %1866 = dma.done [#allocation7], 128
    $region37: #{tpu_custom_call.1} parent=1 // pred_fallthru
      _
    %1867 = vsyncpa [#allocation6], 1
    %1868 = vsyncpa [#allocation7], 1

</llo_original>
